<compile_context>
chip_gen: v7x
topology: tpu7x:2x2x1
jax: 0.10.0
libtpu: 0.0.40
codegen_flags: <defaults>
</compile_context>

<pallas_src>
import jax
import jax.numpy as jnp
import numpy as np
from jax.experimental import pallas as pl
from jax.experimental.pallas import tpu as pltpu

_LANE = 128
_SUBLANE = 8


def _round_up(x, m):
    return ((x + m - 1) // m) * m


def _gru_chunk_kernel(gi_ref, whh_ref, bhn_ref, out_ref, h_scratch):
    """One (batch-tile, time-chunk) block of the GRU recurrence.

    Grid = (n_batch_tiles [parallel], n_time_chunks [arbitrary/serial]).
    gi_ref holds the precomputed, bias-folded input projections packed as
    (Tc, Bt, 3*Hp); whh_ref is the fused transposed hidden weight (Hp, 3*Hp).
    The kernel performs only the serial part: one wide hidden matmul + gate
    elementwise math per step.
    """
    c = pl.program_id(1)

    # New batch tile -> reset the hidden-state carry (h0 = 0, as in nn.GRU).
    # NOTE: this relies on the time axis being the LAST grid axis (fastest),
    # so each batch tile runs all of its time chunks consecutively on one core.
    @pl.when(c == 0)
    def _():
        h_scratch[...] = jnp.zeros_like(h_scratch)

    t_chunk = gi_ref.shape[0]
    hp = h_scratch.shape[-1]

    # Grid-invariant operands: load / broadcast once per chunk, not per step
    # (JAX does not CSE broadcast_in_dim inside the loop).
    whh = whh_ref[...]                                        # (Hp, 3*Hp)
    bhn = jnp.broadcast_to(bhn_ref[...], h_scratch.shape)     # (Bt, Hp)

    def step(s, h):
        gi = gi_ref[s]                                        # (Bt, 3*Hp)
        # One fused MXU matmul for all three gates; f32 accumulation.
        gh = jnp.dot(h.astype(whh.dtype), whh,
                     preferred_element_type=jnp.float32)      # (Bt, 3*Hp)
        # Slices at Hp multiples -> whole-vreg, lane-aligned views.
        r = jax.nn.sigmoid(gi[:, 0:hp] + gh[:, 0:hp])
        z = jax.nn.sigmoid(gi[:, hp:2 * hp] + gh[:, hp:2 * hp])
        n = jnp.tanh(gi[:, 2 * hp:3 * hp] + r * (gh[:, 2 * hp:3 * hp] + bhn))
        h_new = n + z * (h - n)                               # == (1-z)*n + z*h
        out_ref[s] = h_new                                    # lane-dense store
        return h_new

    # Hidden state carried in vregs across the chunk; bounded unroll keeps the
    # LLO scheduler's visibility without blowing up code size / vreg pressure.
    unroll = int(min(8, t_chunk))
    h_last = jax.lax.fori_loop(0, t_chunk, step, h_scratch[...], unroll=unroll)
    h_scratch[...] = h_last                                   # carry across chunks


def _pick_b_tile(bp):
    """Sublane-aligned batch tile; prefer >=2 tiles so v7x megacore has work."""
    if bp <= 8:
        return bp
    for cand in (256, 128, 64, 32, 16, 8):
        if bp % cand == 0 and (bp // cand) >= 2:
            return cand
    return bp


def gru_forward(x_emb, w_ih, w_hh, b_ih, b_hh, *, time_chunk=32,
                matmul_dtype=jnp.float32):
    """PyTorch nn.GRU (num_layers=1, h0=0) forward.

    x_emb: (T, B, E) float32.
    Weights in PyTorch layout, gate order (r, z, n):
      w_ih: (3H, E), w_hh: (3H, H), b_ih/b_hh: (3H,).
    Returns (output (T, B, H), hidden (1, B, H)).
    matmul_dtype: set to jnp.bfloat16 on v6e/v7x for MXU-native hidden weights
    (accumulation stays f32); default f32 for bit-tight parity with PyTorch.
    """
    T, B, E = x_emb.shape
    H = w_hh.shape[1]
    f32 = jnp.float32

    x_emb = x_emb.astype(f32)
    w_ih = jnp.asarray(w_ih, f32)
    w_hh = jnp.asarray(w_hh, f32)
    b_ih = jnp.asarray(b_ih, f32)
    b_hh = jnp.asarray(b_hh, f32)

    # ---- Lane/sublane-aligned padded shapes. --------------------------------
    Hp = _round_up(H, _LANE)             # lane-dense hidden dim -> unmasked vst
    Bp = _round_up(B, _SUBLANE)          # full sublanes for the MXU rows
    b_tile = _pick_b_tile(Bp)
    n_bt = Bp // b_tile

    Tc = max(1, min(time_chunk, T))
    # Shrink the time chunk if the double-buffered gi/output slabs would not
    # fit a conservative VMEM budget (weights accounted for separately).
    itemsize = jnp.dtype(f32).itemsize

    def _chunk_bytes(tc):
        return 2 * (tc * b_tile * 3 * Hp + tc * b_tile * Hp) * itemsize

    while Tc > 1 and _chunk_bytes(Tc) > (24 << 20):
        Tc = max(1, Tc // 2)
    Tp = _round_up(T, Tc)
    n_ch = Tp // Tc

    # ---- Hoisted input projection, emitted directly in padded layout. -------
    # Build (E, 3*Hp) weight with gate blocks at Hp offsets; fold b_ih (all
    # gates) and b_hh (r/z gates only -- the n gate needs b_hh inside the
    # recurrence because of the r * (.) coupling).  Padded columns keep zero
    # weight/bias so padded hidden columns stay exactly 0.
    w_in = jnp.zeros((E, 3 * Hp), f32)
    b_in = jnp.zeros((3 * Hp,), f32)
    for g in range(3):
        w_in = w_in.at[:, g * Hp:g * Hp + H].set(w_ih[g * H:(g + 1) * H].T)
        bias = b_ih[g * H:(g + 1) * H]
        if g < 2:
            bias = bias + b_hh[g * H:(g + 1) * H]
        b_in = b_in.at[g * Hp:g * Hp + H].set(bias)

    gi = x_emb.reshape(T * B, E) @ w_in + b_in                # (T*B, 3*Hp)
    gi = gi.reshape(T, B, 3 * Hp)
    gi = jnp.pad(gi, ((0, Tp - T), (0, Bp - B), (0, 0)))      # single pad op

    # Fused, transposed, zero-padded hidden weight (Hp, 3*Hp) and n-gate bias.
    w_h = jnp.zeros((Hp, 3 * Hp), matmul_dtype)
    for g in range(3):
        w_h = w_h.at[:H, g * Hp:g * Hp + H].set(
            w_hh[g * H:(g + 1) * H].T.astype(matmul_dtype))
    bhn = jnp.zeros((1, Hp), f32).at[0, :H].set(b_hh[2 * H:3 * H])

    # ---- Explicit VMEM budget (v5e default scoped limit is only 16 MiB). ----
    w_itemsize = jnp.dtype(matmul_dtype).itemsize
    gi_block_bytes = Tc * b_tile * 3 * Hp * itemsize
    out_block_bytes = Tc * b_tile * Hp * itemsize
    weight_bytes = Hp * 3 * Hp * w_itemsize + _SUBLANE * _LANE * itemsize
    scratch_bytes = b_tile * Hp * itemsize
    vmem_needed = 2 * (gi_block_bytes + out_block_bytes + weight_bytes) + scratch_bytes
    vmem_limit = int(min(int(vmem_needed * 1.5) + (4 << 20), 128 * 1024 * 1024))

    out = pl.pallas_call(
        _gru_chunk_kernel,
        out_shape=jax.ShapeDtypeStruct((Tp, Bp, Hp), f32),
        grid_spec=pltpu.PrefetchScalarGridSpec(
            num_scalar_prefetch=0,
            grid=(n_bt, n_ch),
            in_specs=[
                pl.BlockSpec((Tc, b_tile, 3 * Hp), lambda b, c: (c, b, 0)),  # gi packed
                pl.BlockSpec((Hp, 3 * Hp), lambda b, c: (0, 0)),             # W_hh fused
                pl.BlockSpec((1, Hp), lambda b, c: (0, 0)),                  # b_hh (n gate)
            ],
            out_specs=pl.BlockSpec((Tc, b_tile, Hp), lambda b, c: (c, b, 0)),
            scratch_shapes=[pltpu.VMEM((b_tile, Hp), f32)],
        ),
        compiler_params=pltpu.CompilerParams(
            # Batch tiles are independent (v7x megacore splits them); the time
            # axis carries the recurrence and must stay sequential + last.
            dimension_semantics=("parallel", "arbitrary"),
            vmem_limit_bytes=vmem_limit),
    )(gi, w_h, bhn)

    output = out[:T, :B, :H]
    hidden = output[T - 1][None]         # final hidden state, (1, B, H)
    return output, hidden


def encoder_rnn_forward(tokens, embedding, w_ih, w_hh, b_ih, b_hh):
    """tokens: (T, B) int32 -> (output (T, B, H), hidden (1, B, H))."""
    # TODO(synk): the nn.Embedding gather is data-dependent indexing; it stays
    # in plain JAX (XLA gather) rather than a rectangular-BlockSpec kernel.
    x_emb = embedding[tokens]
    return gru_forward(x_emb.astype(jnp.float32), w_ih, w_hh, b_ih, b_hh)


def _gru_reference(x_emb, w_ih, w_hh, b_ih, b_hh):
    """Pure-JAX reference (PyTorch GRU semantics) for correctness check."""
    T, B, E = x_emb.shape
    H = w_hh.shape[1]

    def step(h, x_t):
        gi = x_t @ w_ih.T + b_ih
        gh = h @ w_hh.T + b_hh
        r = jax.nn.sigmoid(gi[:, :H] + gh[:, :H])
        z = jax.nn.sigmoid(gi[:, H:2 * H] + gh[:, H:2 * H])
        n = jnp.tanh(gi[:, 2 * H:] + r * gh[:, 2 * H:])
        h_new = (1.0 - z) * n + z * h
        return h_new, h_new

    h0 = jnp.zeros((B, H), jnp.float32)
    h_fin, outs = jax.lax.scan(step, h0, x_emb)
    return outs, h_fin[None]


if __name__ == "__main__":
    # Small deterministic setup consistent with EncoderRNN(__init__):
    token_size, embed_size, hidden_size = 20, 16, 32
    seq_len, batch = 8, 2

    key = jax.random.PRNGKey(0)
    k_emb, k_wih, k_whh, k_bih, k_bhh, k_tok = jax.random.split(key, 6)

    bound = 1.0 / np.sqrt(hidden_size)
    embedding = jax.random.normal(k_emb, (token_size, embed_size), jnp.float32)
    w_ih = jax.random.uniform(k_wih, (3 * hidden_size, embed_size), jnp.float32, -bound, bound)
    w_hh = jax.random.uniform(k_whh, (3 * hidden_size, hidden_size), jnp.float32, -bound, bound)
    b_ih = jax.random.uniform(k_bih, (3 * hidden_size,), jnp.float32, -bound, bound)
    b_hh = jax.random.uniform(k_bhh, (3 * hidden_size,), jnp.float32, -bound, bound)

    tokens = jax.random.randint(k_tok, (seq_len, batch), 0, token_size, jnp.int32)

    output, hidden = encoder_rnn_forward(tokens, embedding, w_ih, w_hh, b_ih, b_hh)
    output = jax.block_until_ready(output)
    hidden = jax.block_until_ready(hidden)

    # Sanity check against a pure-JAX reference.
    x_emb = embedding[tokens].astype(jnp.float32)
    ref_out, ref_hid = _gru_reference(x_emb, w_ih, w_hh, b_ih, b_hh)
    assert output.shape == (seq_len, batch, hidden_size)
    assert hidden.shape == (1, batch, hidden_size)
    np.testing.assert_allclose(np.asarray(output), np.asarray(ref_out), rtol=2e-5, atol=2e-5)
    np.testing.assert_allclose(np.asarray(hidden), np.asarray(ref_hid), rtol=2e-5, atol=2e-5)

    print("KERNEL_OK")
</pallas_src>

<mosaic_0001>
module attributes {stable_mosaic.version = 11 : i64} {
  func.func @_gru_chunk_kernel(%arg0: i32, %arg1: i32, %arg2: memref<8x8x384xf32, #tpu.memory_space<vmem>>, %arg3: memref<128x384xf32, #tpu.memory_space<vmem>>, %arg4: memref<1x128xf32, #tpu.memory_space<vmem>>, %arg5: memref<8x8x128xf32, #tpu.memory_space<vmem>>, %arg6: memref<8x128xf32, #tpu.memory_space<vmem>>) attributes {dimension_semantics = [#tpu.dimension_semantics<parallel>, #tpu.dimension_semantics<arbitrary>], iteration_bounds = array<i64: 1, 1>, scalar_prefetch = 0 : i64, scratch_operands = 1 : i64, tpu.core_type = #tpu.core_type<tc>, window_params = [{transform_indices = @transform_0, window_bounds = array<i64: 8, 8, 384>}, {pipeline_mode = #tpu.pipeline_mode<synchronous>, transform_indices = @transform_1, window_bounds = array<i64: 128, 384>}, {pipeline_mode = #tpu.pipeline_mode<synchronous>, transform_indices = @transform_2, window_bounds = array<i64: 1, 128>}, {transform_indices = @transform_3, window_bounds = array<i64: 8, 8, 128>}]} {
    %c0_i32 = arith.constant 0 : i32
    %0 = arith.cmpi eq, %arg1, %c0_i32 : i32
    %1 = arith.extui %0 : i1 to i32
    %c0_i32_0 = arith.constant 0 : i32
    %2 = arith.cmpi ne, %1, %c0_i32_0 : i32
    scf.if %2 {
      %cst_64 = arith.constant 0.000000e+00 : f32
      %273 = vector.broadcast %cst_64 : f32 to vector<8x128xf32>
      %c0_65 = arith.constant 0 : index
      %c0_66 = arith.constant 0 : index
      %274 = vector.load %arg6[%c0_65, %c0_66] : memref<8x128xf32, #tpu.memory_space<vmem>>, vector<8x128xf32>
      tpu.vector_store %arg6[%c0_65, %c0_66], %273 {strides = array<i32>} : memref<8x128xf32, #tpu.memory_space<vmem>>, vector<8x128xf32>,
    } else {
    }
    %c0 = arith.constant 0 : index
    %c0_1 = arith.constant 0 : index
    %3 = vector.load %arg3[%c0, %c0_1] : memref<128x384xf32, #tpu.memory_space<vmem>>, vector<128x384xf32>
    %c0_2 = arith.constant 0 : index
    %c0_3 = arith.constant 0 : index
    %4 = vector.load %arg4[%c0_2, %c0_3] : memref<1x128xf32, #tpu.memory_space<vmem>>, vector<1x128xf32>
    %5 = vector.shape_cast %4 : vector<1x128xf32> to vector<1x128xf32>
    %6 = vector.broadcast %5 : vector<1x128xf32> to vector<8x128xf32>
    %c0_4 = arith.constant 0 : index
    %c0_5 = arith.constant 0 : index
    %7 = vector.load %arg6[%c0_4, %c0_5] : memref<8x128xf32, #tpu.memory_space<vmem>>, vector<8x128xf32>
    %c0_i32_6 = arith.constant 0 : i32
    %8 = arith.index_cast %c0_i32_6 : i32 to index
    %c0_7 = arith.constant 0 : index
    %c0_8 = arith.constant 0 : index
    %9 = vector.load %arg2[%8, %c0_7, %c0_8] : memref<8x8x384xf32, #tpu.memory_space<vmem>>, vector<1x8x384xf32>
    %10 = vector.shape_cast %9 : vector<1x8x384xf32> to vector<8x384xf32>
    %cst = arith.constant dense<0.000000e+00> : vector<8x384xf32>
    %11 = tpu.matmul %7, %3, %cst {dimension_numbers = #tpu.dot_dimension_numbers<[1], [0], [0], [1], [0, 0, 1, 1], [], []>} : vector<8x128xf32>, vector<128x384xf32>, vector<8x384xf32> -> vector<8x384xf32>
    %12 = vector.extract_strided_slice %10 {offsets = [0, 0], sizes = [8, 128], strides = [1, 1]} : vector<8x384xf32> to vector<8x128xf32>
    %13 = vector.extract_strided_slice %11 {offsets = [0, 0], sizes = [8, 128], strides = [1, 1]} : vector<8x384xf32> to vector<8x128xf32>
    %14 = arith.addf %12, %13 : vector<8x128xf32>
    %15 = arith.negf %14 : vector<8x128xf32>
    %16 = math.exp %15 : vector<8x128xf32>
    %cst_9 = arith.constant 1.000000e+00 : f32
    %17 = vector.broadcast %cst_9 : f32 to vector<8x128xf32>
    %18 = arith.addf %17, %16 : vector<8x128xf32>
    %19 = arith.divf %17, %18 : vector<8x128xf32>
    %20 = vector.extract_strided_slice %10 {offsets = [0, 128], sizes = [8, 128], strides = [1, 1]} : vector<8x384xf32> to vector<8x128xf32>
    %21 = vector.extract_strided_slice %11 {offsets = [0, 128], sizes = [8, 128], strides = [1, 1]} : vector<8x384xf32> to vector<8x128xf32>
    %22 = arith.addf %20, %21 : vector<8x128xf32>
    %23 = arith.negf %22 : vector<8x128xf32>
    %24 = math.exp %23 : vector<8x128xf32>
    %cst_10 = arith.constant 1.000000e+00 : f32
    %25 = vector.broadcast %cst_10 : f32 to vector<8x128xf32>
    %26 = arith.addf %25, %24 : vector<8x128xf32>
    %27 = arith.divf %25, %26 : vector<8x128xf32>
    %28 = vector.extract_strided_slice %10 {offsets = [0, 256], sizes = [8, 128], strides = [1, 1]} : vector<8x384xf32> to vector<8x128xf32>
    %29 = vector.extract_strided_slice %11 {offsets = [0, 256], sizes = [8, 128], strides = [1, 1]} : vector<8x384xf32> to vector<8x128xf32>
    %30 = arith.addf %29, %6 : vector<8x128xf32>
    %31 = arith.mulf %19, %30 : vector<8x128xf32>
    %32 = arith.addf %28, %31 : vector<8x128xf32>
    %33 = math.tanh %32 : vector<8x128xf32>
    %34 = arith.subf %7, %33 : vector<8x128xf32>
    %35 = arith.mulf %27, %34 : vector<8x128xf32>
    %36 = arith.addf %33, %35 : vector<8x128xf32>
    %37 = arith.index_cast %c0_i32_6 : i32 to index
    %c0_11 = arith.constant 0 : index
    %c0_12 = arith.constant 0 : index
    %38 = vector.load %arg5[%37, %c0_11, %c0_12] : memref<8x8x128xf32, #tpu.memory_space<vmem>>, vector<1x8x128xf32>
    %39 = vector.shape_cast %38 : vector<1x8x128xf32> to vector<8x128xf32>
    %40 = vector.shape_cast %36 : vector<8x128xf32> to vector<1x8x128xf32>
    tpu.vector_store %arg5[%37, %c0_11, %c0_12], %40 {strides = array<i32>} : memref<8x8x128xf32, #tpu.memory_space<vmem>>, vector<1x8x128xf32>,
    %c1_i32 = arith.constant 1 : i32
    %41 = arith.index_cast %c1_i32 : i32 to index
    %c0_13 = arith.constant 0 : index
    %c0_14 = arith.constant 0 : index
    %42 = vector.load %arg2[%41, %c0_13, %c0_14] : memref<8x8x384xf32, #tpu.memory_space<vmem>>, vector<1x8x384xf32>
    %43 = vector.shape_cast %42 : vector<1x8x384xf32> to vector<8x384xf32>
    %cst_15 = arith.constant dense<0.000000e+00> : vector<8x384xf32>
    %44 = tpu.matmul %36, %3, %cst_15 {dimension_numbers = #tpu.dot_dimension_numbers<[1], [0], [0], [1], [0, 0, 1, 1], [], []>} : vector<8x128xf32>, vector<128x384xf32>, vector<8x384xf32> -> vector<8x384xf32>
    %45 = vector.extract_strided_slice %43 {offsets = [0, 0], sizes = [8, 128], strides = [1, 1]} : vector<8x384xf32> to vector<8x128xf32>
    %46 = vector.extract_strided_slice %44 {offsets = [0, 0], sizes = [8, 128], strides = [1, 1]} : vector<8x384xf32> to vector<8x128xf32>
    %47 = arith.addf %45, %46 : vector<8x128xf32>
    %48 = arith.negf %47 : vector<8x128xf32>
    %49 = math.exp %48 : vector<8x128xf32>
    %cst_16 = arith.constant 1.000000e+00 : f32
    %50 = vector.broadcast %cst_16 : f32 to vector<8x128xf32>
    %51 = arith.addf %50, %49 : vector<8x128xf32>
    %52 = arith.divf %50, %51 : vector<8x128xf32>
    %53 = vector.extract_strided_slice %43 {offsets = [0, 128], sizes = [8, 128], strides = [1, 1]} : vector<8x384xf32> to vector<8x128xf32>
    %54 = vector.extract_strided_slice %44 {offsets = [0, 128], sizes = [8, 128], strides = [1, 1]} : vector<8x384xf32> to vector<8x128xf32>
    %55 = arith.addf %53, %54 : vector<8x128xf32>
    %56 = arith.negf %55 : vector<8x128xf32>
    %57 = math.exp %56 : vector<8x128xf32>
    %cst_17 = arith.constant 1.000000e+00 : f32
    %58 = vector.broadcast %cst_17 : f32 to vector<8x128xf32>
    %59 = arith.addf %58, %57 : vector<8x128xf32>
    %60 = arith.divf %58, %59 : vector<8x128xf32>
    %61 = vector.extract_strided_slice %43 {offsets = [0, 256], sizes = [8, 128], strides = [1, 1]} : vector<8x384xf32> to vector<8x128xf32>
    %62 = vector.extract_strided_slice %44 {offsets = [0, 256], sizes = [8, 128], strides = [1, 1]} : vector<8x384xf32> to vector<8x128xf32>
    %63 = arith.addf %62, %6 : vector<8x128xf32>
    %64 = arith.mulf %52, %63 : vector<8x128xf32>
    %65 = arith.addf %61, %64 : vector<8x128xf32>
    %66 = math.tanh %65 : vector<8x128xf32>
    %67 = arith.subf %36, %66 : vector<8x128xf32>
    %68 = arith.mulf %60, %67 : vector<8x128xf32>
    %69 = arith.addf %66, %68 : vector<8x128xf32>
    %70 = arith.index_cast %c1_i32 : i32 to index
    %c0_18 = arith.constant 0 : index
    %c0_19 = arith.constant 0 : index
    %71 = vector.load %arg5[%70, %c0_18, %c0_19] : memref<8x8x128xf32, #tpu.memory_space<vmem>>, vector<1x8x128xf32>
    %72 = vector.shape_cast %71 : vector<1x8x128xf32> to vector<8x128xf32>
    %73 = vector.shape_cast %69 : vector<8x128xf32> to vector<1x8x128xf32>
    tpu.vector_store %arg5[%70, %c0_18, %c0_19], %73 {strides = array<i32>} : memref<8x8x128xf32, #tpu.memory_space<vmem>>, vector<1x8x128xf32>,
    %c2_i32 = arith.constant 2 : i32
    %74 = arith.index_cast %c2_i32 : i32 to index
    %c0_20 = arith.constant 0 : index
    %c0_21 = arith.constant 0 : index
    %75 = vector.load %arg2[%74, %c0_20, %c0_21] : memref<8x8x384xf32, #tpu.memory_space<vmem>>, vector<1x8x384xf32>
    %76 = vector.shape_cast %75 : vector<1x8x384xf32> to vector<8x384xf32>
    %cst_22 = arith.constant dense<0.000000e+00> : vector<8x384xf32>
    %77 = tpu.matmul %69, %3, %cst_22 {dimension_numbers = #tpu.dot_dimension_numbers<[1], [0], [0], [1], [0, 0, 1, 1], [], []>} : vector<8x128xf32>, vector<128x384xf32>, vector<8x384xf32> -> vector<8x384xf32>
    %78 = vector.extract_strided_slice %76 {offsets = [0, 0], sizes = [8, 128], strides = [1, 1]} : vector<8x384xf32> to vector<8x128xf32>
    %79 = vector.extract_strided_slice %77 {offsets = [0, 0], sizes = [8, 128], strides = [1, 1]} : vector<8x384xf32> to vector<8x128xf32>
    %80 = arith.addf %78, %79 : vector<8x128xf32>
    %81 = arith.negf %80 : vector<8x128xf32>
    %82 = math.exp %81 : vector<8x128xf32>
    %cst_23 = arith.constant 1.000000e+00 : f32
    %83 = vector.broadcast %cst_23 : f32 to vector<8x128xf32>
    %84 = arith.addf %83, %82 : vector<8x128xf32>
    %85 = arith.divf %83, %84 : vector<8x128xf32>
    %86 = vector.extract_strided_slice %76 {offsets = [0, 128], sizes = [8, 128], strides = [1, 1]} : vector<8x384xf32> to vector<8x128xf32>
    %87 = vector.extract_strided_slice %77 {offsets = [0, 128], sizes = [8, 128], strides = [1, 1]} : vector<8x384xf32> to vector<8x128xf32>
    %88 = arith.addf %86, %87 : vector<8x128xf32>
    %89 = arith.negf %88 : vector<8x128xf32>
    %90 = math.exp %89 : vector<8x128xf32>
    %cst_24 = arith.constant 1.000000e+00 : f32
    %91 = vector.broadcast %cst_24 : f32 to vector<8x128xf32>
    %92 = arith.addf %91, %90 : vector<8x128xf32>
    %93 = arith.divf %91, %92 : vector<8x128xf32>
    %94 = vector.extract_strided_slice %76 {offsets = [0, 256], sizes = [8, 128], strides = [1, 1]} : vector<8x384xf32> to vector<8x128xf32>
    %95 = vector.extract_strided_slice %77 {offsets = [0, 256], sizes = [8, 128], strides = [1, 1]} : vector<8x384xf32> to vector<8x128xf32>
    %96 = arith.addf %95, %6 : vector<8x128xf32>
    %97 = arith.mulf %85, %96 : vector<8x128xf32>
    %98 = arith.addf %94, %97 : vector<8x128xf32>
    %99 = math.tanh %98 : vector<8x128xf32>
    %100 = arith.subf %69, %99 : vector<8x128xf32>
    %101 = arith.mulf %93, %100 : vector<8x128xf32>
    %102 = arith.addf %99, %101 : vector<8x128xf32>
    %103 = arith.index_cast %c2_i32 : i32 to index
    %c0_25 = arith.constant 0 : index
    %c0_26 = arith.constant 0 : index
    %104 = vector.load %arg5[%103, %c0_25, %c0_26] : memref<8x8x128xf32, #tpu.memory_space<vmem>>, vector<1x8x128xf32>
    %105 = vector.shape_cast %104 : vector<1x8x128xf32> to vector<8x128xf32>
    %106 = vector.shape_cast %102 : vector<8x128xf32> to vector<1x8x128xf32>
    tpu.vector_store %arg5[%103, %c0_25, %c0_26], %106 {strides = array<i32>} : memref<8x8x128xf32, #tpu.memory_space<vmem>>, vector<1x8x128xf32>,
    %c3_i32 = arith.constant 3 : i32
    %107 = arith.index_cast %c3_i32 : i32 to index
    %c0_27 = arith.constant 0 : index
    %c0_28 = arith.constant 0 : index
    %108 = vector.load %arg2[%107, %c0_27, %c0_28] : memref<8x8x384xf32, #tpu.memory_space<vmem>>, vector<1x8x384xf32>
    %109 = vector.shape_cast %108 : vector<1x8x384xf32> to vector<8x384xf32>
    %cst_29 = arith.constant dense<0.000000e+00> : vector<8x384xf32>
    %110 = tpu.matmul %102, %3, %cst_29 {dimension_numbers = #tpu.dot_dimension_numbers<[1], [0], [0], [1], [0, 0, 1, 1], [], []>} : vector<8x128xf32>, vector<128x384xf32>, vector<8x384xf32> -> vector<8x384xf32>
    %111 = vector.extract_strided_slice %109 {offsets = [0, 0], sizes = [8, 128], strides = [1, 1]} : vector<8x384xf32> to vector<8x128xf32>
    %112 = vector.extract_strided_slice %110 {offsets = [0, 0], sizes = [8, 128], strides = [1, 1]} : vector<8x384xf32> to vector<8x128xf32>
    %113 = arith.addf %111, %112 : vector<8x128xf32>
    %114 = arith.negf %113 : vector<8x128xf32>
    %115 = math.exp %114 : vector<8x128xf32>
    %cst_30 = arith.constant 1.000000e+00 : f32
    %116 = vector.broadcast %cst_30 : f32 to vector<8x128xf32>
    %117 = arith.addf %116, %115 : vector<8x128xf32>
    %118 = arith.divf %116, %117 : vector<8x128xf32>
    %119 = vector.extract_strided_slice %109 {offsets = [0, 128], sizes = [8, 128], strides = [1, 1]} : vector<8x384xf32> to vector<8x128xf32>
    %120 = vector.extract_strided_slice %110 {offsets = [0, 128], sizes = [8, 128], strides = [1, 1]} : vector<8x384xf32> to vector<8x128xf32>
    %121 = arith.addf %119, %120 : vector<8x128xf32>
    %122 = arith.negf %121 : vector<8x128xf32>
    %123 = math.exp %122 : vector<8x128xf32>
    %cst_31 = arith.constant 1.000000e+00 : f32
    %124 = vector.broadcast %cst_31 : f32 to vector<8x128xf32>
    %125 = arith.addf %124, %123 : vector<8x128xf32>
    %126 = arith.divf %124, %125 : vector<8x128xf32>
    %127 = vector.extract_strided_slice %109 {offsets = [0, 256], sizes = [8, 128], strides = [1, 1]} : vector<8x384xf32> to vector<8x128xf32>
    %128 = vector.extract_strided_slice %110 {offsets = [0, 256], sizes = [8, 128], strides = [1, 1]} : vector<8x384xf32> to vector<8x128xf32>
    %129 = arith.addf %128, %6 : vector<8x128xf32>
    %130 = arith.mulf %118, %129 : vector<8x128xf32>
    %131 = arith.addf %127, %130 : vector<8x128xf32>
    %132 = math.tanh %131 : vector<8x128xf32>
    %133 = arith.subf %102, %132 : vector<8x128xf32>
    %134 = arith.mulf %126, %133 : vector<8x128xf32>
    %135 = arith.addf %132, %134 : vector<8x128xf32>
    %136 = arith.index_cast %c3_i32 : i32 to index
    %c0_32 = arith.constant 0 : index
    %c0_33 = arith.constant 0 : index
    %137 = vector.load %arg5[%136, %c0_32, %c0_33] : memref<8x8x128xf32, #tpu.memory_space<vmem>>, vector<1x8x128xf32>
    %138 = vector.shape_cast %137 : vector<1x8x128xf32> to vector<8x128xf32>
    %139 = vector.shape_cast %135 : vector<8x128xf32> to vector<1x8x128xf32>
    tpu.vector_store %arg5[%136, %c0_32, %c0_33], %139 {strides = array<i32>} : memref<8x8x128xf32, #tpu.memory_space<vmem>>, vector<1x8x128xf32>,
    %c4_i32 = arith.constant 4 : i32
    %140 = arith.index_cast %c4_i32 : i32 to index
    %c0_34 = arith.constant 0 : index
    %c0_35 = arith.constant 0 : index
    %141 = vector.load %arg2[%140, %c0_34, %c0_35] : memref<8x8x384xf32, #tpu.memory_space<vmem>>, vector<1x8x384xf32>
    %142 = vector.shape_cast %141 : vector<1x8x384xf32> to vector<8x384xf32>
    %cst_36 = arith.constant dense<0.000000e+00> : vector<8x384xf32>
    %143 = tpu.matmul %135, %3, %cst_36 {dimension_numbers = #tpu.dot_dimension_numbers<[1], [0], [0], [1], [0, 0, 1, 1], [], []>} : vector<8x128xf32>, vector<128x384xf32>, vector<8x384xf32> -> vector<8x384xf32>
    %144 = vector.extract_strided_slice %142 {offsets = [0, 0], sizes = [8, 128], strides = [1, 1]} : vector<8x384xf32> to vector<8x128xf32>
    %145 = vector.extract_strided_slice %143 {offsets = [0, 0], sizes = [8, 128], strides = [1, 1]} : vector<8x384xf32> to vector<8x128xf32>
    %146 = arith.addf %144, %145 : vector<8x128xf32>
    %147 = arith.negf %146 : vector<8x128xf32>
    %148 = math.exp %147 : vector<8x128xf32>
    %cst_37 = arith.constant 1.000000e+00 : f32
    %149 = vector.broadcast %cst_37 : f32 to vector<8x128xf32>
    %150 = arith.addf %149, %148 : vector<8x128xf32>
    %151 = arith.divf %149, %150 : vector<8x128xf32>
    %152 = vector.extract_strided_slice %142 {offsets = [0, 128], sizes = [8, 128], strides = [1, 1]} : vector<8x384xf32> to vector<8x128xf32>
    %153 = vector.extract_strided_slice %143 {offsets = [0, 128], sizes = [8, 128], strides = [1, 1]} : vector<8x384xf32> to vector<8x128xf32>
    %154 = arith.addf %152, %153 : vector<8x128xf32>
    %155 = arith.negf %154 : vector<8x128xf32>
    %156 = math.exp %155 : vector<8x128xf32>
    %cst_38 = arith.constant 1.000000e+00 : f32
    %157 = vector.broadcast %cst_38 : f32 to vector<8x128xf32>
    %158 = arith.addf %157, %156 : vector<8x128xf32>
    %159 = arith.divf %157, %158 : vector<8x128xf32>
    %160 = vector.extract_strided_slice %142 {offsets = [0, 256], sizes = [8, 128], strides = [1, 1]} : vector<8x384xf32> to vector<8x128xf32>
    %161 = vector.extract_strided_slice %143 {offsets = [0, 256], sizes = [8, 128], strides = [1, 1]} : vector<8x384xf32> to vector<8x128xf32>
    %162 = arith.addf %161, %6 : vector<8x128xf32>
    %163 = arith.mulf %151, %162 : vector<8x128xf32>
    %164 = arith.addf %160, %163 : vector<8x128xf32>
    %165 = math.tanh %164 : vector<8x128xf32>
    %166 = arith.subf %135, %165 : vector<8x128xf32>
    %167 = arith.mulf %159, %166 : vector<8x128xf32>
    %168 = arith.addf %165, %167 : vector<8x128xf32>
    %169 = arith.index_cast %c4_i32 : i32 to index
    %c0_39 = arith.constant 0 : index
    %c0_40 = arith.constant 0 : index
    %170 = vector.load %arg5[%169, %c0_39, %c0_40] : memref<8x8x128xf32, #tpu.memory_space<vmem>>, vector<1x8x128xf32>
    %171 = vector.shape_cast %170 : vector<1x8x128xf32> to vector<8x128xf32>
    %172 = vector.shape_cast %168 : vector<8x128xf32> to vector<1x8x128xf32>
    tpu.vector_store %arg5[%169, %c0_39, %c0_40], %172 {strides = array<i32>} : memref<8x8x128xf32, #tpu.memory_space<vmem>>, vector<1x8x128xf32>,
    %c5_i32 = arith.constant 5 : i32
    %173 = arith.index_cast %c5_i32 : i32 to index
    %c0_41 = arith.constant 0 : index
    %c0_42 = arith.constant 0 : index
    %174 = vector.load %arg2[%173, %c0_41, %c0_42] : memref<8x8x384xf32, #tpu.memory_space<vmem>>, vector<1x8x384xf32>
    %175 = vector.shape_cast %174 : vector<1x8x384xf32> to vector<8x384xf32>
    %cst_43 = arith.constant dense<0.000000e+00> : vector<8x384xf32>
    %176 = tpu.matmul %168, %3, %cst_43 {dimension_numbers = #tpu.dot_dimension_numbers<[1], [0], [0], [1], [0, 0, 1, 1], [], []>} : vector<8x128xf32>, vector<128x384xf32>, vector<8x384xf32> -> vector<8x384xf32>
    %177 = vector.extract_strided_slice %175 {offsets = [0, 0], sizes = [8, 128], strides = [1, 1]} : vector<8x384xf32> to vector<8x128xf32>
    %178 = vector.extract_strided_slice %176 {offsets = [0, 0], sizes = [8, 128], strides = [1, 1]} : vector<8x384xf32> to vector<8x128xf32>
    %179 = arith.addf %177, %178 : vector<8x128xf32>
    %180 = arith.negf %179 : vector<8x128xf32>
    %181 = math.exp %180 : vector<8x128xf32>
    %cst_44 = arith.constant 1.000000e+00 : f32
    %182 = vector.broadcast %cst_44 : f32 to vector<8x128xf32>
    %183 = arith.addf %182, %181 : vector<8x128xf32>
    %184 = arith.divf %182, %183 : vector<8x128xf32>
    %185 = vector.extract_strided_slice %175 {offsets = [0, 128], sizes = [8, 128], strides = [1, 1]} : vector<8x384xf32> to vector<8x128xf32>
    %186 = vector.extract_strided_slice %176 {offsets = [0, 128], sizes = [8, 128], strides = [1, 1]} : vector<8x384xf32> to vector<8x128xf32>
    %187 = arith.addf %185, %186 : vector<8x128xf32>
    %188 = arith.negf %187 : vector<8x128xf32>
    %189 = math.exp %188 : vector<8x128xf32>
    %cst_45 = arith.constant 1.000000e+00 : f32
    %190 = vector.broadcast %cst_45 : f32 to vector<8x128xf32>
    %191 = arith.addf %190, %189 : vector<8x128xf32>
    %192 = arith.divf %190, %191 : vector<8x128xf32>
    %193 = vector.extract_strided_slice %175 {offsets = [0, 256], sizes = [8, 128], strides = [1, 1]} : vector<8x384xf32> to vector<8x128xf32>
    %194 = vector.extract_strided_slice %176 {offsets = [0, 256], sizes = [8, 128], strides = [1, 1]} : vector<8x384xf32> to vector<8x128xf32>
    %195 = arith.addf %194, %6 : vector<8x128xf32>
    %196 = arith.mulf %184, %195 : vector<8x128xf32>
    %197 = arith.addf %193, %196 : vector<8x128xf32>
    %198 = math.tanh %197 : vector<8x128xf32>
    %199 = arith.subf %168, %198 : vector<8x128xf32>
    %200 = arith.mulf %192, %199 : vector<8x128xf32>
    %201 = arith.addf %198, %200 : vector<8x128xf32>
    %202 = arith.index_cast %c5_i32 : i32 to index
    %c0_46 = arith.constant 0 : index
    %c0_47 = arith.constant 0 : index
    %203 = vector.load %arg5[%202, %c0_46, %c0_47] : memref<8x8x128xf32, #tpu.memory_space<vmem>>, vector<1x8x128xf32>
    %204 = vector.shape_cast %203 : vector<1x8x128xf32> to vector<8x128xf32>
    %205 = vector.shape_cast %201 : vector<8x128xf32> to vector<1x8x128xf32>
    tpu.vector_store %arg5[%202, %c0_46, %c0_47], %205 {strides = array<i32>} : memref<8x8x128xf32, #tpu.memory_space<vmem>>, vector<1x8x128xf32>,
    %c6_i32 = arith.constant 6 : i32
    %206 = arith.index_cast %c6_i32 : i32 to index
    %c0_48 = arith.constant 0 : index
    %c0_49 = arith.constant 0 : index
    %207 = vector.load %arg2[%206, %c0_48, %c0_49] : memref<8x8x384xf32, #tpu.memory_space<vmem>>, vector<1x8x384xf32>
    %208 = vector.shape_cast %207 : vector<1x8x384xf32> to vector<8x384xf32>
    %cst_50 = arith.constant dense<0.000000e+00> : vector<8x384xf32>
    %209 = tpu.matmul %201, %3, %cst_50 {dimension_numbers = #tpu.dot_dimension_numbers<[1], [0], [0], [1], [0, 0, 1, 1], [], []>} : vector<8x128xf32>, vector<128x384xf32>, vector<8x384xf32> -> vector<8x384xf32>
    %210 = vector.extract_strided_slice %208 {offsets = [0, 0], sizes = [8, 128], strides = [1, 1]} : vector<8x384xf32> to vector<8x128xf32>
    %211 = vector.extract_strided_slice %209 {offsets = [0, 0], sizes = [8, 128], strides = [1, 1]} : vector<8x384xf32> to vector<8x128xf32>
    %212 = arith.addf %210, %211 : vector<8x128xf32>
    %213 = arith.negf %212 : vector<8x128xf32>
    %214 = math.exp %213 : vector<8x128xf32>
    %cst_51 = arith.constant 1.000000e+00 : f32
    %215 = vector.broadcast %cst_51 : f32 to vector<8x128xf32>
    %216 = arith.addf %215, %214 : vector<8x128xf32>
    %217 = arith.divf %215, %216 : vector<8x128xf32>
    %218 = vector.extract_strided_slice %208 {offsets = [0, 128], sizes = [8, 128], strides = [1, 1]} : vector<8x384xf32> to vector<8x128xf32>
    %219 = vector.extract_strided_slice %209 {offsets = [0, 128], sizes = [8, 128], strides = [1, 1]} : vector<8x384xf32> to vector<8x128xf32>
    %220 = arith.addf %218, %219 : vector<8x128xf32>
    %221 = arith.negf %220 : vector<8x128xf32>
    %222 = math.exp %221 : vector<8x128xf32>
    %cst_52 = arith.constant 1.000000e+00 : f32
    %223 = vector.broadcast %cst_52 : f32 to vector<8x128xf32>
    %224 = arith.addf %223, %222 : vector<8x128xf32>
    %225 = arith.divf %223, %224 : vector<8x128xf32>
    %226 = vector.extract_strided_slice %208 {offsets = [0, 256], sizes = [8, 128], strides = [1, 1]} : vector<8x384xf32> to vector<8x128xf32>
    %227 = vector.extract_strided_slice %209 {offsets = [0, 256], sizes = [8, 128], strides = [1, 1]} : vector<8x384xf32> to vector<8x128xf32>
    %228 = arith.addf %227, %6 : vector<8x128xf32>
    %229 = arith.mulf %217, %228 : vector<8x128xf32>
    %230 = arith.addf %226, %229 : vector<8x128xf32>
    %231 = math.tanh %230 : vector<8x128xf32>
    %232 = arith.subf %201, %231 : vector<8x128xf32>
    %233 = arith.mulf %225, %232 : vector<8x128xf32>
    %234 = arith.addf %231, %233 : vector<8x128xf32>
    %235 = arith.index_cast %c6_i32 : i32 to index
    %c0_53 = arith.constant 0 : index
    %c0_54 = arith.constant 0 : index
    %236 = vector.load %arg5[%235, %c0_53, %c0_54] : memref<8x8x128xf32, #tpu.memory_space<vmem>>, vector<1x8x128xf32>
    %237 = vector.shape_cast %236 : vector<1x8x128xf32> to vector<8x128xf32>
    %238 = vector.shape_cast %234 : vector<8x128xf32> to vector<1x8x128xf32>
    tpu.vector_store %arg5[%235, %c0_53, %c0_54], %238 {strides = array<i32>} : memref<8x8x128xf32, #tpu.memory_space<vmem>>, vector<1x8x128xf32>,
    %c7_i32 = arith.constant 7 : i32
    %239 = arith.index_cast %c7_i32 : i32 to index
    %c0_55 = arith.constant 0 : index
    %c0_56 = arith.constant 0 : index
    %240 = vector.load %arg2[%239, %c0_55, %c0_56] : memref<8x8x384xf32, #tpu.memory_space<vmem>>, vector<1x8x384xf32>
    %241 = vector.shape_cast %240 : vector<1x8x384xf32> to vector<8x384xf32>
    %cst_57 = arith.constant dense<0.000000e+00> : vector<8x384xf32>
    %242 = tpu.matmul %234, %3, %cst_57 {dimension_numbers = #tpu.dot_dimension_numbers<[1], [0], [0], [1], [0, 0, 1, 1], [], []>} : vector<8x128xf32>, vector<128x384xf32>, vector<8x384xf32> -> vector<8x384xf32>
    %243 = vector.extract_strided_slice %241 {offsets = [0, 0], sizes = [8, 128], strides = [1, 1]} : vector<8x384xf32> to vector<8x128xf32>
    %244 = vector.extract_strided_slice %242 {offsets = [0, 0], sizes = [8, 128], strides = [1, 1]} : vector<8x384xf32> to vector<8x128xf32>
    %245 = arith.addf %243, %244 : vector<8x128xf32>
    %246 = arith.negf %245 : vector<8x128xf32>
    %247 = math.exp %246 : vector<8x128xf32>
    %cst_58 = arith.constant 1.000000e+00 : f32
    %248 = vector.broadcast %cst_58 : f32 to vector<8x128xf32>
    %249 = arith.addf %248, %247 : vector<8x128xf32>
    %250 = arith.divf %248, %249 : vector<8x128xf32>
    %251 = vector.extract_strided_slice %241 {offsets = [0, 128], sizes = [8, 128], strides = [1, 1]} : vector<8x384xf32> to vector<8x128xf32>
    %252 = vector.extract_strided_slice %242 {offsets = [0, 128], sizes = [8, 128], strides = [1, 1]} : vector<8x384xf32> to vector<8x128xf32>
    %253 = arith.addf %251, %252 : vector<8x128xf32>
    %254 = arith.negf %253 : vector<8x128xf32>
    %255 = math.exp %254 : vector<8x128xf32>
    %cst_59 = arith.constant 1.000000e+00 : f32
    %256 = vector.broadcast %cst_59 : f32 to vector<8x128xf32>
    %257 = arith.addf %256, %255 : vector<8x128xf32>
    %258 = arith.divf %256, %257 : vector<8x128xf32>
    %259 = vector.extract_strided_slice %241 {offsets = [0, 256], sizes = [8, 128], strides = [1, 1]} : vector<8x384xf32> to vector<8x128xf32>
    %260 = vector.extract_strided_slice %242 {offsets = [0, 256], sizes = [8, 128], strides = [1, 1]} : vector<8x384xf32> to vector<8x128xf32>
    %261 = arith.addf %260, %6 : vector<8x128xf32>
    %262 = arith.mulf %250, %261 : vector<8x128xf32>
    %263 = arith.addf %259, %262 : vector<8x128xf32>
    %264 = math.tanh %263 : vector<8x128xf32>
    %265 = arith.subf %234, %264 : vector<8x128xf32>
    %266 = arith.mulf %258, %265 : vector<8x128xf32>
    %267 = arith.addf %264, %266 : vector<8x128xf32>
    %268 = arith.index_cast %c7_i32 : i32 to index
    %c0_60 = arith.constant 0 : index
    %c0_61 = arith.constant 0 : index
    %269 = vector.load %arg5[%268, %c0_60, %c0_61] : memref<8x8x128xf32, #tpu.memory_space<vmem>>, vector<1x8x128xf32>
    %270 = vector.shape_cast %269 : vector<1x8x128xf32> to vector<8x128xf32>
    %271 = vector.shape_cast %267 : vector<8x128xf32> to vector<1x8x128xf32>
    tpu.vector_store %arg5[%268, %c0_60, %c0_61], %271 {strides = array<i32>} : memref<8x8x128xf32, #tpu.memory_space<vmem>>, vector<1x8x128xf32>,
    %c8_i32 = arith.constant 8 : i32
    %c0_62 = arith.constant 0 : index
    %c0_63 = arith.constant 0 : index
    %272 = vector.load %arg6[%c0_62, %c0_63] : memref<8x128xf32, #tpu.memory_space<vmem>>, vector<8x128xf32>
    tpu.vector_store %arg6[%c0_62, %c0_63], %267 {strides = array<i32>} : memref<8x128xf32, #tpu.memory_space<vmem>>, vector<8x128xf32>,
    return
  }
  func.func @transform_0(%arg0: i32, %arg1: i32) -> (i32, i32, i32) {
    %c0_i32 = arith.constant 0 : i32
    %c0_i32_0 = arith.constant 0 : i32
    return %arg1, %arg0, %c0_i32 : i32, i32, i32
  }
  func.func @transform_1(%arg0: i32, %arg1: i32) -> (i32, i32) {
    %c0_i32 = arith.constant 0 : i32
    %c0_i32_0 = arith.constant 0 : i32
    %c0_i32_1 = arith.constant 0 : i32
    return %c0_i32, %c0_i32_0 : i32, i32
  }
  func.func @transform_2(%arg0: i32, %arg1: i32) -> (i32, i32) {
    %c0_i32 = arith.constant 0 : i32
    %c0_i32_0 = arith.constant 0 : i32
    %c0_i32_1 = arith.constant 0 : i32
    return %c0_i32, %c0_i32_0 : i32, i32
  }
  func.func @transform_3(%arg0: i32, %arg1: i32) -> (i32, i32, i32) {
    %c0_i32 = arith.constant 0 : i32
    %c0_i32_0 = arith.constant 0 : i32
    return %arg1, %arg0, %c0_i32 : i32, i32, i32
  }
}

</mosaic_0001>

<llo_original>
// kernel: tpu_custom_call.1
$region0: #{tpu_custom_call.1}
  #allocation0 [shape = 'u32[]', space=smem, size = 0x4, offset = 0x4, fixed_abs, tag = 'smem constant byte address 0x4 - core index']
  #allocation1 [shape = 'u32[144,128]{1,0:T(1,128)}', space=vmem, size = 0x12000, scoped, tag = 'internal scratch']
  #allocation2 [shape = 'f32[8,128]{1,0:T(8,128)}', space=vmem, size = 0x1000, scoped, tag = 'scratch operand']
  %s0 = inlined_call_operand.hbm [shape: f32[8,8,384], index: 0, kind: input, shape index: {}]
  %s1 = inlined_call_operand.hbm [shape: f32[128,384], index: 1, kind: input, shape index: {}]
  %s2 = inlined_call_operand.vmem [shape: f32[1,128], index: 2, kind: input, shape index: {}]
  %s3 = inlined_call_operand.hbm [shape: f32[8,8,128], index: 3, kind: output, shape index: {}]
  %s4 = sld [smem:[#allocation0]]
  $region34: #{tpu_custom_call.1} parent=0
    _
  %s6 = ssub.s32 1, %s4
  %s7 = scalar_select 0, %s6, %s4
  $region1: #{tpu_custom_call.1} parent=0
    #allocation3 [shape = 'u8[98304]{0}', space=vmem, size = 0x18000, scoped, tag = 'input window, operand 0, single buffered']
    #allocation4 [shape = 's32[1]{0}', space=sflag, size = 0x4, scoped, tag = 'scoped memory for tpu_custom_call.1']
    #allocation5 [shape = 's32[1]{0}', space=sflag, size = 0x4, scoped, tag = 'scoped memory for tpu_custom_call.1']
    #allocation6 [shape = 'u8[196608]{0}', space=vmem, size = 0x30000, scoped, tag = 'input window, operand 1, single buffered']
    #allocation7 [shape = 's32[1]{0}', space=sflag, size = 0x4, scoped, tag = 'scoped memory for tpu_custom_call.1']
    #allocation8 [shape = 'u8[32768]{0}', space=vmem, size = 0x8000, scoped, tag = 'output window, operand 0, single buffered']
    %8 = vsyncpa [#allocation4], 0
    %9 = vsyncpa [#allocation7], 0
    %10 = vsyncpa [#allocation5], 0
    // Predicated region
    $region2: #{tpu_custom_call.1} parent=1 // pred_check
      _
    $region3: #{tpu_custom_call.1} parent=1 // pred_check_branch
      %12 = sbr.rel (0) target = $region5
    $region4: #{tpu_custom_call.1} parent=1 // pred_region
      %s14 = ssub.s32 3072, 3072
      %15 = vsyncadd [#allocation4], %s14
      %s16 = sshll.u32 [#allocation3], 4
      %s17 = int_to_ptr.vmem [resolvable:$true] %s16
      %22 = dma.hbm_to_vmem [thread:$0]  %s0, 3072, %s17, [#allocation4], 384, 384, 24
    $region5: #{tpu_custom_call.1} parent=1 // pred_fallthru
      _
    // Predicated region
    $region6: #{tpu_custom_call.1} parent=1 // pred_check
      _
    $region7: #{tpu_custom_call.1} parent=1 // pred_check_branch
      %24 = sbr.rel (0) target = $region9
    $region8: #{tpu_custom_call.1} parent=1 // pred_region
      %s26 = ssub.s32 6144, 6144
      %27 = vsyncadd [#allocation7], %s26
      %s28 = sshll.u32 [#allocation6], 4
      %s29 = int_to_ptr.vmem [resolvable:$true] %s28
      %34 = dma.hbm_to_vmem [thread:$0]  %s1, 6144, %s29, [#allocation7], 384, 384, 24
    $region9: #{tpu_custom_call.1} parent=1 // pred_fallthru
      _
    // Predicated region
    $region10: #{tpu_custom_call.1} parent=1 // pred_check
      _
    $region11: #{tpu_custom_call.1} parent=1 // pred_check_branch
      %36 = sbr.rel (0) target = $region13
    $region12: #{tpu_custom_call.1} parent=1 // pred_region
      _
    $region13: #{tpu_custom_call.1} parent=1 // pred_fallthru
      _
    // Predicated region
    $region14: #{tpu_custom_call.1} parent=1 // pred_check
      _
    $region15: #{tpu_custom_call.1} parent=1 // pred_check_branch
      %38 = sbr.rel (0) target = $region17
    $region16: #{tpu_custom_call.1} parent=1 // pred_region
      %39 = dma.done [#allocation4], 3072
    $region17: #{tpu_custom_call.1} parent=1 // pred_fallthru
      _
    // Predicated region
    $region18: #{tpu_custom_call.1} parent=1 // pred_check
      _
    $region19: #{tpu_custom_call.1} parent=1 // pred_check_branch
      %41 = sbr.rel (0) target = $region21
    $region20: #{tpu_custom_call.1} parent=1 // pred_region
      %42 = dma.done [#allocation7], 6144
    $region21: #{tpu_custom_call.1} parent=1 // pred_fallthru
      _
    %p43 = scmp.eq.s32.totalorder 0, 0
    // Predicated region
    $region22: #{tpu_custom_call.1} parent=1 // pred_check
      %p44 = pneg %p43
    $region23: #{tpu_custom_call.1} parent=1 // pred_check_branch
      %46 = sbr.rel (%p44) target = $region25
    $region24: #{tpu_custom_call.1} parent=1 // pred_region
      %47 = vst [vmem:[#allocation2] sm:$0xff] 0.0
    $region25: #{tpu_custom_call.1} parent=1 // pred_fallthru
      _
    %v48 = vld [vmem:[#allocation6] sm:$0xff]
    %v49 = vld [vmem:[#allocation6 + $0x8] sm:$0xff]
    %v50 = vld [vmem:[#allocation6 + $0x10] sm:$0xff]
    %v51 = vld [vmem:[#allocation6 + $0x18] sm:$0xff]
    %v52 = vld [vmem:[#allocation6 + $0x20] sm:$0xff]
    %v53 = vld [vmem:[#allocation6 + $0x28] sm:$0xff]
    %v54 = vld [vmem:[#allocation6 + $0x30] sm:$0xff]
    %v55 = vld [vmem:[#allocation6 + $0x38] sm:$0xff]
    %v56 = vld [vmem:[#allocation6 + $0x40] sm:$0xff]
    %v57 = vld [vmem:[#allocation6 + $0x48] sm:$0xff]
    %v58 = vld [vmem:[#allocation6 + $0x50] sm:$0xff]
    %v59 = vld [vmem:[#allocation6 + $0x58] sm:$0xff]
    %v60 = vld [vmem:[#allocation6 + $0x60] sm:$0xff]
    %v61 = vld [vmem:[#allocation6 + $0x68] sm:$0xff]
    %v62 = vld [vmem:[#allocation6 + $0x70] sm:$0xff]
    %v63 = vld [vmem:[#allocation6 + $0x78] sm:$0xff]
    %v64 = vld [vmem:[#allocation6 + $0x80] sm:$0xff]
    %v65 = vld [vmem:[#allocation6 + $0x88] sm:$0xff]
    %v66 = vld [vmem:[#allocation6 + $0x90] sm:$0xff]
    %v67 = vld [vmem:[#allocation6 + $0x98] sm:$0xff]
    %v68 = vld [vmem:[#allocation6 + $0xa0] sm:$0xff]
    %v69 = vld [vmem:[#allocation6 + $0xa8] sm:$0xff]
    %v70 = vld [vmem:[#allocation6 + $0xb0] sm:$0xff]
    %v71 = vld [vmem:[#allocation6 + $0xb8] sm:$0xff]
    %v72 = vld [vmem:[#allocation6 + $0xc0] sm:$0xff]
    %v73 = vld [vmem:[#allocation6 + $0xc8] sm:$0xff]
    %v74 = vld [vmem:[#allocation6 + $0xd0] sm:$0xff]
    %v75 = vld [vmem:[#allocation6 + $0xd8] sm:$0xff]
    %v76 = vld [vmem:[#allocation6 + $0xe0] sm:$0xff]
    %v77 = vld [vmem:[#allocation6 + $0xe8] sm:$0xff]
    %v78 = vld [vmem:[#allocation6 + $0xf0] sm:$0xff]
    %v79 = vld [vmem:[#allocation6 + $0xf8] sm:$0xff]
    %v80 = vld [vmem:[#allocation6 + $0x100] sm:$0xff]
    %v81 = vld [vmem:[#allocation6 + $0x108] sm:$0xff]
    %v82 = vld [vmem:[#allocation6 + $0x110] sm:$0xff]
    %v83 = vld [vmem:[#allocation6 + $0x118] sm:$0xff]
    %v84 = vld [vmem:[#allocation6 + $0x120] sm:$0xff]
    %v85 = vld [vmem:[#allocation6 + $0x128] sm:$0xff]
    %v86 = vld [vmem:[#allocation6 + $0x130] sm:$0xff]
    %v87 = vld [vmem:[#allocation6 + $0x138] sm:$0xff]
    %v88 = vld [vmem:[#allocation6 + $0x140] sm:$0xff]
    %v89 = vld [vmem:[#allocation6 + $0x148] sm:$0xff]
    %v90 = vld [vmem:[#allocation6 + $0x150] sm:$0xff]
    %v91 = vld [vmem:[#allocation6 + $0x158] sm:$0xff]
    %v92 = vld [vmem:[#allocation6 + $0x160] sm:$0xff]
    %v93 = vld [vmem:[#allocation6 + $0x168] sm:$0xff]
    %v94 = vld [vmem:[#allocation6 + $0x170] sm:$0xff]
    %v95 = vld [vmem:[#allocation6 + $0x178] sm:$0xff]
    %v96 = vld [vmem:[%s2] sm:$0x1]
    %v98 = vlaneseq
    %v99 = vshrl.u32 %v98, 7
    %v100 = vsub.s32 0, %v99
    %v101 = vrot.slane %v96, %v100
    %v103 = vld [vmem:[#allocation2] sm:$0xff]
    %v104 = vld [vmem:[#allocation3] sm:$0xff]
    %v105 = vld [vmem:[#allocation3 + $0x8] sm:$0xff]
    %v106 = vld [vmem:[#allocation3 + $0x10] sm:$0xff]
    %107 = vmatprep.subr.mxu0 %v49
    %108 = vmatpush1.msra.mxu0 %v48
    %109 = vmatprep.subr.mxu0 %v52
    %110 = vmatpush1.msra.mxu0 %v51
    %111 = vmatprep.subr.mxu0 %v55
    %112 = vmatpush1.msra.mxu0 %v54
    %113 = vmatprep.subr.mxu0 %v58
    %114 = vmatpush1.msra.mxu0 %v57
    %115 = vmatprep.subr.mxu0 %v61
    %116 = vmatpush1.msra.mxu0 %v60
    %117 = vmatprep.subr.mxu0 %v64
    %118 = vmatpush1.msra.mxu0 %v63
    %119 = vmatprep.subr.mxu0 %v67
    %120 = vmatpush1.msra.mxu0 %v66
    %121 = vmatprep.subr.mxu0 %v70
    %122 = vmatpush1.msra.mxu0 %v69
    %123 = vmatprep.subr.mxu0 %v73
    %124 = vmatpush1.msra.mxu0 %v72
    %125 = vmatprep.subr.mxu0 %v76
    %126 = vmatpush1.msra.mxu0 %v75
    %127 = vmatprep.subr.mxu0 %v79
    %128 = vmatpush1.msra.mxu0 %v78
    %129 = vmatprep.subr.mxu0 %v82
    %130 = vmatpush1.msra.mxu0 %v81
    %131 = vmatprep.subr.mxu0 %v85
    %132 = vmatpush1.msra.mxu0 %v84
    %133 = vmatprep.subr.mxu0 %v88
    %134 = vmatpush1.msra.mxu0 %v87
    %135 = vmatprep.subr.mxu0 %v91
    %136 = vmatpush1.msra.mxu0 %v90
    %137 = vmatprep.subr.mxu0 %v94
    %138 = vmatpush1.msra.mxu0 %v93
    %139 = vmatprep.subr.mxu0 0.0
    %140 = vmatpush1.msra.mxu0 0.0
    %141 = vmatprep.subr.mxu0 0.0
    %142 = vmatpush1.msra.mxu0 0.0
    %143 = vmatprep.subr.mxu0 0.0
    %144 = vmatpush1.msra.mxu0 0.0
    %145 = vmatprep.subr.mxu0 0.0
    %146 = vmatpush1.msra.mxu0 0.0
    %147 = vmatprep.subr.mxu0 0.0
    %148 = vmatpush1.msra.mxu0 0.0
    %149 = vmatprep.subr.mxu0 0.0
    %150 = vmatpush1.msra.mxu0 0.0
    %151 = vmatprep.subr.mxu0 0.0
    %152 = vmatpush1.msra.mxu0 0.0
    %153 = vmatprep.subr.mxu0 0.0
    %154 = vmatpush1.msra.mxu0 0.0
    %155 = vmatprep.subr.mxu0 0.0
    %156 = vmatpush1.msra.mxu0 0.0
    %157 = vmatprep.subr.mxu0 0.0
    %158 = vmatpush1.msra.mxu0 0.0
    %159 = vmatprep.subr.mxu0 0.0
    %160 = vmatpush1.msra.mxu0 0.0
    %161 = vmatprep.subr.mxu0 0.0
    %162 = vmatpush1.msra.mxu0 0.0
    %163 = vmatprep.subr.mxu0 0.0
    %164 = vmatpush1.msra.mxu0 0.0
    %165 = vmatprep.subr.mxu0 0.0
    %166 = vmatpush1.msra.mxu0 0.0
    %167 = vmatprep.subr.mxu0 0.0
    %168 = vmatpush1.msra.mxu0 0.0
    %169 = vmatprep.subr.mxu0 0.0
    %170 = vmatpush1.msra.mxu0 0.0
    %171 = vmatprep.mubr.f32.mxu0 0.0
    %172 = vmatmul.mubr.f32.gmra.mrb[0].mxu0 %v103
    %v173 = vpop.f32.mrb[0].mxu0
    %v174 = vadd.f32 0.0, %v173
    %v175 = vpop.f32.mrb[0].mxu0
    %v176 = vadd.f32 0.0, %v175
    %177 = vdwg.mxu0
    %178 = vmatprep.subr.mxu0 0.0
    %179 = vmatpush1.msra.mxu0 %v50
    %180 = vmatprep.subr.mxu0 0.0
    %181 = vmatpush1.msra.mxu0 %v53
    %182 = vmatprep.subr.mxu0 0.0
    %183 = vmatpush1.msra.mxu0 %v56
    %184 = vmatprep.subr.mxu0 0.0
    %185 = vmatpush1.msra.mxu0 %v59
    %186 = vmatprep.subr.mxu0 0.0
    %187 = vmatpush1.msra.mxu0 %v62
    %188 = vmatprep.subr.mxu0 0.0
    %189 = vmatpush1.msra.mxu0 %v65
    %190 = vmatprep.subr.mxu0 0.0
    %191 = vmatpush1.msra.mxu0 %v68
    %192 = vmatprep.subr.mxu0 0.0
    %193 = vmatpush1.msra.mxu0 %v71
    %194 = vmatprep.subr.mxu0 0.0
    %195 = vmatpush1.msra.mxu0 %v74
    %196 = vmatprep.subr.mxu0 0.0
    %197 = vmatpush1.msra.mxu0 %v77
    %198 = vmatprep.subr.mxu0 0.0
    %199 = vmatpush1.msra.mxu0 %v80
    %200 = vmatprep.subr.mxu0 0.0
    %201 = vmatpush1.msra.mxu0 %v83
    %202 = vmatprep.subr.mxu0 0.0
    %203 = vmatpush1.msra.mxu0 %v86
    %204 = vmatprep.subr.mxu0 0.0
    %205 = vmatpush1.msra.mxu0 %v89
    %206 = vmatprep.subr.mxu0 0.0
    %207 = vmatpush1.msra.mxu0 %v92
    %208 = vmatprep.subr.mxu0 0.0
    %209 = vmatpush1.msra.mxu0 %v95
    %210 = vmatprep.subr.mxu0 0.0
    %211 = vmatpush1.msra.mxu0 0.0
    %212 = vmatprep.subr.mxu0 0.0
    %213 = vmatpush1.msra.mxu0 0.0
    %214 = vmatprep.subr.mxu0 0.0
    %215 = vmatpush1.msra.mxu0 0.0
    %216 = vmatprep.subr.mxu0 0.0
    %217 = vmatpush1.msra.mxu0 0.0
    %218 = vmatprep.subr.mxu0 0.0
    %219 = vmatpush1.msra.mxu0 0.0
    %220 = vmatprep.subr.mxu0 0.0
    %221 = vmatpush1.msra.mxu0 0.0
    %222 = vmatprep.subr.mxu0 0.0
    %223 = vmatpush1.msra.mxu0 0.0
    %224 = vmatprep.subr.mxu0 0.0
    %225 = vmatpush1.msra.mxu0 0.0
    %226 = vmatprep.subr.mxu0 0.0
    %227 = vmatpush1.msra.mxu0 0.0
    %228 = vmatprep.subr.mxu0 0.0
    %229 = vmatpush1.msra.mxu0 0.0
    %230 = vmatprep.subr.mxu0 0.0
    %231 = vmatpush1.msra.mxu0 0.0
    %232 = vmatprep.subr.mxu0 0.0
    %233 = vmatpush1.msra.mxu0 0.0
    %234 = vmatprep.subr.mxu0 0.0
    %235 = vmatpush1.msra.mxu0 0.0
    %236 = vmatprep.subr.mxu0 0.0
    %237 = vmatpush1.msra.mxu0 0.0
    %238 = vmatprep.subr.mxu0 0.0
    %239 = vmatpush1.msra.mxu0 0.0
    %240 = vmatprep.subr.mxu0 0.0
    %241 = vmatpush1.msra.mxu0 0.0
    %242 = vmatprep.mubr.f32.mxu0 0.0
    %243 = vmatmul.mubr.f32.gmra.mrb[0].mxu0 %v103
    %v244 = vpop.f32.mrb[0].mxu0
    %v245 = vadd.f32 0.0, %v244
    %v246 = vpop.f32.mrb[0].mxu0
    %247 = vdwg.mxu0
    %v248 = vadd.f32 %v104, %v174
    %v249 = vxor.u32 %v248, 2147483648
    %v250 = vmul.f32 %v249, 1.442695
    %v251 = vpow.pop %v250
    %v252 = vadd.f32 %v251, 1.0
    %v253 = vrcp.pop %v252
    %v254 = vmul.f32 1.0, %v253
    %v255 = vadd.f32 %v105, %v176
    %v256 = vxor.u32 %v255, 2147483648
    %v257 = vmul.f32 %v256, 1.442695
    %v258 = vpow.pop %v257
    %v259 = vadd.f32 %v258, 1.0
    %v260 = vrcp.pop %v259
    %v261 = vmul.f32 1.0, %v260
    %v262 = vadd.f32 %v245, %v101
    %v263 = vmul.f32 %v254, %v262
    %v264 = vadd.f32 %v106, %v263
    %v265 = vtanh.pop %v264
    %v266 = vsub.f32 %v103, %v265
    %v267 = vmul.f32 %v261, %v266
    %v268 = vadd.f32 %v265, %v267
    %269 = vst [vmem:[#allocation8] sm:$0xff] %v268
    %s270 = scalar_lea.vmem [#allocation3], 24
    %v271 = vld [vmem:[%s270] sm:$0xff]
    %v272 = vld [vmem:[%s270 + $0x8] sm:$0xff]
    %v273 = vld [vmem:[%s270 + $0x10] sm:$0xff]
    %274 = vmatprep.subr.mxu0 %v49
    %275 = vmatpush1.msra.mxu0 %v48
    %276 = vmatprep.subr.mxu0 %v52
    %277 = vmatpush1.msra.mxu0 %v51
    %278 = vmatprep.subr.mxu0 %v55
    %279 = vmatpush1.msra.mxu0 %v54
    %280 = vmatprep.subr.mxu0 %v58
    %281 = vmatpush1.msra.mxu0 %v57
    %282 = vmatprep.subr.mxu0 %v61
    %283 = vmatpush1.msra.mxu0 %v60
    %284 = vmatprep.subr.mxu0 %v64
    %285 = vmatpush1.msra.mxu0 %v63
    %286 = vmatprep.subr.mxu0 %v67
    %287 = vmatpush1.msra.mxu0 %v66
    %288 = vmatprep.subr.mxu0 %v70
    %289 = vmatpush1.msra.mxu0 %v69
    %290 = vmatprep.subr.mxu0 %v73
    %291 = vmatpush1.msra.mxu0 %v72
    %292 = vmatprep.subr.mxu0 %v76
    %293 = vmatpush1.msra.mxu0 %v75
    %294 = vmatprep.subr.mxu0 %v79
    %295 = vmatpush1.msra.mxu0 %v78
    %296 = vmatprep.subr.mxu0 %v82
    %297 = vmatpush1.msra.mxu0 %v81
    %298 = vmatprep.subr.mxu0 %v85
    %299 = vmatpush1.msra.mxu0 %v84
    %300 = vmatprep.subr.mxu0 %v88
    %301 = vmatpush1.msra.mxu0 %v87
    %302 = vmatprep.subr.mxu0 %v91
    %303 = vmatpush1.msra.mxu0 %v90
    %304 = vmatprep.subr.mxu0 %v94
    %305 = vmatpush1.msra.mxu0 %v93
    %306 = vmatprep.subr.mxu0 0.0
    %307 = vmatpush1.msra.mxu0 0.0
    %308 = vmatprep.subr.mxu0 0.0
    %309 = vmatpush1.msra.mxu0 0.0
    %310 = vmatprep.subr.mxu0 0.0
    %311 = vmatpush1.msra.mxu0 0.0
    %312 = vmatprep.subr.mxu0 0.0
    %313 = vmatpush1.msra.mxu0 0.0
    %314 = vmatprep.subr.mxu0 0.0
    %315 = vmatpush1.msra.mxu0 0.0
    %316 = vmatprep.subr.mxu0 0.0
    %317 = vmatpush1.msra.mxu0 0.0
    %318 = vmatprep.subr.mxu0 0.0
    %319 = vmatpush1.msra.mxu0 0.0
    %320 = vmatprep.subr.mxu0 0.0
    %321 = vmatpush1.msra.mxu0 0.0
    %322 = vmatprep.subr.mxu0 0.0
    %323 = vmatpush1.msra.mxu0 0.0
    %324 = vmatprep.subr.mxu0 0.0
    %325 = vmatpush1.msra.mxu0 0.0
    %326 = vmatprep.subr.mxu0 0.0
    %327 = vmatpush1.msra.mxu0 0.0
    %328 = vmatprep.subr.mxu0 0.0
    %329 = vmatpush1.msra.mxu0 0.0
    %330 = vmatprep.subr.mxu0 0.0
    %331 = vmatpush1.msra.mxu0 0.0
    %332 = vmatprep.subr.mxu0 0.0
    %333 = vmatpush1.msra.mxu0 0.0
    %334 = vmatprep.subr.mxu0 0.0
    %335 = vmatpush1.msra.mxu0 0.0
    %336 = vmatprep.subr.mxu0 0.0
    %337 = vmatpush1.msra.mxu0 0.0
    %338 = vmatprep.mubr.f32.mxu0 0.0
    %339 = vmatmul.mubr.f32.gmra.mrb[0].mxu0 %v268
    %v340 = vpop.f32.mrb[0].mxu0
    %v341 = vadd.f32 0.0, %v340
    %v342 = vpop.f32.mrb[0].mxu0
    %v343 = vadd.f32 0.0, %v342
    %344 = vdwg.mxu0
    %345 = vmatprep.subr.mxu0 0.0
    %346 = vmatpush1.msra.mxu0 %v50
    %347 = vmatprep.subr.mxu0 0.0
    %348 = vmatpush1.msra.mxu0 %v53
    %349 = vmatprep.subr.mxu0 0.0
    %350 = vmatpush1.msra.mxu0 %v56
    %351 = vmatprep.subr.mxu0 0.0
    %352 = vmatpush1.msra.mxu0 %v59
    %353 = vmatprep.subr.mxu0 0.0
    %354 = vmatpush1.msra.mxu0 %v62
    %355 = vmatprep.subr.mxu0 0.0
    %356 = vmatpush1.msra.mxu0 %v65
    %357 = vmatprep.subr.mxu0 0.0
    %358 = vmatpush1.msra.mxu0 %v68
    %359 = vmatprep.subr.mxu0 0.0
    %360 = vmatpush1.msra.mxu0 %v71
    %361 = vmatprep.subr.mxu0 0.0
    %362 = vmatpush1.msra.mxu0 %v74
    %363 = vmatprep.subr.mxu0 0.0
    %364 = vmatpush1.msra.mxu0 %v77
    %365 = vmatprep.subr.mxu0 0.0
    %366 = vmatpush1.msra.mxu0 %v80
    %367 = vmatprep.subr.mxu0 0.0
    %368 = vmatpush1.msra.mxu0 %v83
    %369 = vmatprep.subr.mxu0 0.0
    %370 = vmatpush1.msra.mxu0 %v86
    %371 = vmatprep.subr.mxu0 0.0
    %372 = vmatpush1.msra.mxu0 %v89
    %373 = vmatprep.subr.mxu0 0.0
    %374 = vmatpush1.msra.mxu0 %v92
    %375 = vmatprep.subr.mxu0 0.0
    %376 = vmatpush1.msra.mxu0 %v95
    %377 = vmatprep.subr.mxu0 0.0
    %378 = vmatpush1.msra.mxu0 0.0
    %379 = vmatprep.subr.mxu0 0.0
    %380 = vmatpush1.msra.mxu0 0.0
    %381 = vmatprep.subr.mxu0 0.0
    %382 = vmatpush1.msra.mxu0 0.0
    %383 = vmatprep.subr.mxu0 0.0
    %384 = vmatpush1.msra.mxu0 0.0
    %385 = vmatprep.subr.mxu0 0.0
    %386 = vmatpush1.msra.mxu0 0.0
    %387 = vmatprep.subr.mxu0 0.0
    %388 = vmatpush1.msra.mxu0 0.0
    %389 = vmatprep.subr.mxu0 0.0
    %390 = vmatpush1.msra.mxu0 0.0
    %391 = vmatprep.subr.mxu0 0.0
    %392 = vmatpush1.msra.mxu0 0.0
    %393 = vmatprep.subr.mxu0 0.0
    %394 = vmatpush1.msra.mxu0 0.0
    %395 = vmatprep.subr.mxu0 0.0
    %396 = vmatpush1.msra.mxu0 0.0
    %397 = vmatprep.subr.mxu0 0.0
    %398 = vmatpush1.msra.mxu0 0.0
    %399 = vmatprep.subr.mxu0 0.0
    %400 = vmatpush1.msra.mxu0 0.0
    %401 = vmatprep.subr.mxu0 0.0
    %402 = vmatpush1.msra.mxu0 0.0
    %403 = vmatprep.subr.mxu0 0.0
    %404 = vmatpush1.msra.mxu0 0.0
    %405 = vmatprep.subr.mxu0 0.0
    %406 = vmatpush1.msra.mxu0 0.0
    %407 = vmatprep.subr.mxu0 0.0
    %408 = vmatpush1.msra.mxu0 0.0
    %409 = vmatprep.mubr.f32.mxu0 0.0
    %410 = vmatmul.mubr.f32.gmra.mrb[0].mxu0 %v268
    %v411 = vpop.f32.mrb[0].mxu0
    %v412 = vadd.f32 0.0, %v411
    %v413 = vpop.f32.mrb[0].mxu0
    %414 = vdwg.mxu0
    %v415 = vadd.f32 %v271, %v341
    %v416 = vxor.u32 %v415, 2147483648
    %v417 = vmul.f32 %v416, 1.442695
    %v418 = vpow.pop %v417
    %v419 = vadd.f32 %v418, 1.0
    %v420 = vrcp.pop %v419
    %v421 = vmul.f32 1.0, %v420
    %v422 = vadd.f32 %v272, %v343
    %v423 = vxor.u32 %v422, 2147483648
    %v424 = vmul.f32 %v423, 1.442695
    %v425 = vpow.pop %v424
    %v426 = vadd.f32 %v425, 1.0
    %v427 = vrcp.pop %v426
    %v428 = vmul.f32 1.0, %v427
    %v429 = vadd.f32 %v412, %v101
    %v430 = vmul.f32 %v421, %v429
    %v431 = vadd.f32 %v273, %v430
    %v432 = vtanh.pop %v431
    %v433 = vsub.f32 %v268, %v432
    %v434 = vmul.f32 %v428, %v433
    %v435 = vadd.f32 %v432, %v434
    %s436 = scalar_lea.vmem [#allocation8], 8
    %437 = vst [vmem:[%s436] sm:$0xff] %v435
    %s438 = scalar_lea.vmem [#allocation3], 48
    %v439 = vld [vmem:[%s438] sm:$0xff]
    %v440 = vld [vmem:[%s438 + $0x8] sm:$0xff]
    %v441 = vld [vmem:[%s438 + $0x10] sm:$0xff]
    %442 = vmatprep.subr.mxu0 %v49
    %443 = vmatpush1.msra.mxu0 %v48
    %444 = vmatprep.subr.mxu0 %v52
    %445 = vmatpush1.msra.mxu0 %v51
    %446 = vmatprep.subr.mxu0 %v55
    %447 = vmatpush1.msra.mxu0 %v54
    %448 = vmatprep.subr.mxu0 %v58
    %449 = vmatpush1.msra.mxu0 %v57
    %450 = vmatprep.subr.mxu0 %v61
    %451 = vmatpush1.msra.mxu0 %v60
    %452 = vmatprep.subr.mxu0 %v64
    %453 = vmatpush1.msra.mxu0 %v63
    %454 = vmatprep.subr.mxu0 %v67
    %455 = vmatpush1.msra.mxu0 %v66
    %456 = vmatprep.subr.mxu0 %v70
    %457 = vmatpush1.msra.mxu0 %v69
    %458 = vmatprep.subr.mxu0 %v73
    %459 = vmatpush1.msra.mxu0 %v72
    %460 = vmatprep.subr.mxu0 %v76
    %461 = vmatpush1.msra.mxu0 %v75
    %462 = vmatprep.subr.mxu0 %v79
    %463 = vmatpush1.msra.mxu0 %v78
    %464 = vmatprep.subr.mxu0 %v82
    %465 = vmatpush1.msra.mxu0 %v81
    %466 = vmatprep.subr.mxu0 %v85
    %467 = vmatpush1.msra.mxu0 %v84
    %468 = vmatprep.subr.mxu0 %v88
    %469 = vmatpush1.msra.mxu0 %v87
    %470 = vmatprep.subr.mxu0 %v91
    %471 = vmatpush1.msra.mxu0 %v90
    %472 = vmatprep.subr.mxu0 %v94
    %473 = vmatpush1.msra.mxu0 %v93
    %474 = vmatprep.subr.mxu0 0.0
    %475 = vmatpush1.msra.mxu0 0.0
    %476 = vmatprep.subr.mxu0 0.0
    %477 = vmatpush1.msra.mxu0 0.0
    %478 = vmatprep.subr.mxu0 0.0
    %479 = vmatpush1.msra.mxu0 0.0
    %480 = vmatprep.subr.mxu0 0.0
    %481 = vmatpush1.msra.mxu0 0.0
    %482 = vmatprep.subr.mxu0 0.0
    %483 = vmatpush1.msra.mxu0 0.0
    %484 = vmatprep.subr.mxu0 0.0
    %485 = vmatpush1.msra.mxu0 0.0
    %486 = vmatprep.subr.mxu0 0.0
    %487 = vmatpush1.msra.mxu0 0.0
    %488 = vmatprep.subr.mxu0 0.0
    %489 = vmatpush1.msra.mxu0 0.0
    %490 = vmatprep.subr.mxu0 0.0
    %491 = vmatpush1.msra.mxu0 0.0
    %492 = vmatprep.subr.mxu0 0.0
    %493 = vmatpush1.msra.mxu0 0.0
    %494 = vmatprep.subr.mxu0 0.0
    %495 = vmatpush1.msra.mxu0 0.0
    %496 = vmatprep.subr.mxu0 0.0
    %497 = vmatpush1.msra.mxu0 0.0
    %498 = vmatprep.subr.mxu0 0.0
    %499 = vmatpush1.msra.mxu0 0.0
    %500 = vmatprep.subr.mxu0 0.0
    %501 = vmatpush1.msra.mxu0 0.0
    %502 = vmatprep.subr.mxu0 0.0
    %503 = vmatpush1.msra.mxu0 0.0
    %504 = vmatprep.subr.mxu0 0.0
    %505 = vmatpush1.msra.mxu0 0.0
    %506 = vmatprep.mubr.f32.mxu0 0.0
    %507 = vmatmul.mubr.f32.gmra.mrb[0].mxu0 %v435
    %v508 = vpop.f32.mrb[0].mxu0
    %v509 = vadd.f32 0.0, %v508
    %v510 = vpop.f32.mrb[0].mxu0
    %v511 = vadd.f32 0.0, %v510
    %512 = vdwg.mxu0
    %513 = vmatprep.subr.mxu0 0.0
    %514 = vmatpush1.msra.mxu0 %v50
    %515 = vmatprep.subr.mxu0 0.0
    %516 = vmatpush1.msra.mxu0 %v53
    %517 = vmatprep.subr.mxu0 0.0
    %518 = vmatpush1.msra.mxu0 %v56
    %519 = vmatprep.subr.mxu0 0.0
    %520 = vmatpush1.msra.mxu0 %v59
    %521 = vmatprep.subr.mxu0 0.0
    %522 = vmatpush1.msra.mxu0 %v62
    %523 = vmatprep.subr.mxu0 0.0
    %524 = vmatpush1.msra.mxu0 %v65
    %525 = vmatprep.subr.mxu0 0.0
    %526 = vmatpush1.msra.mxu0 %v68
    %527 = vmatprep.subr.mxu0 0.0
    %528 = vmatpush1.msra.mxu0 %v71
    %529 = vmatprep.subr.mxu0 0.0
    %530 = vmatpush1.msra.mxu0 %v74
    %531 = vmatprep.subr.mxu0 0.0
    %532 = vmatpush1.msra.mxu0 %v77
    %533 = vmatprep.subr.mxu0 0.0
    %534 = vmatpush1.msra.mxu0 %v80
    %535 = vmatprep.subr.mxu0 0.0
    %536 = vmatpush1.msra.mxu0 %v83
    %537 = vmatprep.subr.mxu0 0.0
    %538 = vmatpush1.msra.mxu0 %v86
    %539 = vmatprep.subr.mxu0 0.0
    %540 = vmatpush1.msra.mxu0 %v89
    %541 = vmatprep.subr.mxu0 0.0
    %542 = vmatpush1.msra.mxu0 %v92
    %543 = vmatprep.subr.mxu0 0.0
    %544 = vmatpush1.msra.mxu0 %v95
    %545 = vmatprep.subr.mxu0 0.0
    %546 = vmatpush1.msra.mxu0 0.0
    %547 = vmatprep.subr.mxu0 0.0
    %548 = vmatpush1.msra.mxu0 0.0
    %549 = vmatprep.subr.mxu0 0.0
    %550 = vmatpush1.msra.mxu0 0.0
    %551 = vmatprep.subr.mxu0 0.0
    %552 = vmatpush1.msra.mxu0 0.0
    %553 = vmatprep.subr.mxu0 0.0
    %554 = vmatpush1.msra.mxu0 0.0
    %555 = vmatprep.subr.mxu0 0.0
    %556 = vmatpush1.msra.mxu0 0.0
    %557 = vmatprep.subr.mxu0 0.0
    %558 = vmatpush1.msra.mxu0 0.0
    %559 = vmatprep.subr.mxu0 0.0
    %560 = vmatpush1.msra.mxu0 0.0
    %561 = vmatprep.subr.mxu0 0.0
    %562 = vmatpush1.msra.mxu0 0.0
    %563 = vmatprep.subr.mxu0 0.0
    %564 = vmatpush1.msra.mxu0 0.0
    %565 = vmatprep.subr.mxu0 0.0
    %566 = vmatpush1.msra.mxu0 0.0
    %567 = vmatprep.subr.mxu0 0.0
    %568 = vmatpush1.msra.mxu0 0.0
    %569 = vmatprep.subr.mxu0 0.0
    %570 = vmatpush1.msra.mxu0 0.0
    %571 = vmatprep.subr.mxu0 0.0
    %572 = vmatpush1.msra.mxu0 0.0
    %573 = vmatprep.subr.mxu0 0.0
    %574 = vmatpush1.msra.mxu0 0.0
    %575 = vmatprep.subr.mxu0 0.0
    %576 = vmatpush1.msra.mxu0 0.0
    %577 = vmatprep.mubr.f32.mxu0 0.0
    %578 = vmatmul.mubr.f32.gmra.mrb[0].mxu0 %v435
    %v579 = vpop.f32.mrb[0].mxu0
    %v580 = vadd.f32 0.0, %v579
    %v581 = vpop.f32.mrb[0].mxu0
    %582 = vdwg.mxu0
    %v583 = vadd.f32 %v439, %v509
    %v584 = vxor.u32 %v583, 2147483648
    %v585 = vmul.f32 %v584, 1.442695
    %v586 = vpow.pop %v585
    %v587 = vadd.f32 %v586, 1.0
    %v588 = vrcp.pop %v587
    %v589 = vmul.f32 1.0, %v588
    %v590 = vadd.f32 %v440, %v511
    %v591 = vxor.u32 %v590, 2147483648
    %v592 = vmul.f32 %v591, 1.442695
    %v593 = vpow.pop %v592
    %v594 = vadd.f32 %v593, 1.0
    %v595 = vrcp.pop %v594
    %v596 = vmul.f32 1.0, %v595
    %v597 = vadd.f32 %v580, %v101
    %v598 = vmul.f32 %v589, %v597
    %v599 = vadd.f32 %v441, %v598
    %v600 = vtanh.pop %v599
    %v601 = vsub.f32 %v435, %v600
    %v602 = vmul.f32 %v596, %v601
    %v603 = vadd.f32 %v600, %v602
    %s604 = scalar_lea.vmem [#allocation8], 16
    %605 = vst [vmem:[%s604] sm:$0xff] %v603
    %s606 = scalar_lea.vmem [#allocation3], 72
    %v607 = vld [vmem:[%s606] sm:$0xff]
    %v608 = vld [vmem:[%s606 + $0x8] sm:$0xff]
    %v609 = vld [vmem:[%s606 + $0x10] sm:$0xff]
    %610 = vmatprep.subr.mxu0 %v49
    %611 = vmatpush1.msra.mxu0 %v48
    %612 = vmatprep.subr.mxu0 %v52
    %613 = vmatpush1.msra.mxu0 %v51
    %614 = vmatprep.subr.mxu0 %v55
    %615 = vmatpush1.msra.mxu0 %v54
    %616 = vmatprep.subr.mxu0 %v58
    %617 = vmatpush1.msra.mxu0 %v57
    %618 = vmatprep.subr.mxu0 %v61
    %619 = vmatpush1.msra.mxu0 %v60
    %620 = vmatprep.subr.mxu0 %v64
    %621 = vmatpush1.msra.mxu0 %v63
    %622 = vmatprep.subr.mxu0 %v67
    %623 = vmatpush1.msra.mxu0 %v66
    %624 = vmatprep.subr.mxu0 %v70
    %625 = vmatpush1.msra.mxu0 %v69
    %626 = vmatprep.subr.mxu0 %v73
    %627 = vmatpush1.msra.mxu0 %v72
    %628 = vmatprep.subr.mxu0 %v76
    %629 = vmatpush1.msra.mxu0 %v75
    %630 = vmatprep.subr.mxu0 %v79
    %631 = vmatpush1.msra.mxu0 %v78
    %632 = vmatprep.subr.mxu0 %v82
    %633 = vmatpush1.msra.mxu0 %v81
    %634 = vmatprep.subr.mxu0 %v85
    %635 = vmatpush1.msra.mxu0 %v84
    %636 = vmatprep.subr.mxu0 %v88
    %637 = vmatpush1.msra.mxu0 %v87
    %638 = vmatprep.subr.mxu0 %v91
    %639 = vmatpush1.msra.mxu0 %v90
    %640 = vmatprep.subr.mxu0 %v94
    %641 = vmatpush1.msra.mxu0 %v93
    %642 = vmatprep.subr.mxu0 0.0
    %643 = vmatpush1.msra.mxu0 0.0
    %644 = vmatprep.subr.mxu0 0.0
    %645 = vmatpush1.msra.mxu0 0.0
    %646 = vmatprep.subr.mxu0 0.0
    %647 = vmatpush1.msra.mxu0 0.0
    %648 = vmatprep.subr.mxu0 0.0
    %649 = vmatpush1.msra.mxu0 0.0
    %650 = vmatprep.subr.mxu0 0.0
    %651 = vmatpush1.msra.mxu0 0.0
    %652 = vmatprep.subr.mxu0 0.0
    %653 = vmatpush1.msra.mxu0 0.0
    %654 = vmatprep.subr.mxu0 0.0
    %655 = vmatpush1.msra.mxu0 0.0
    %656 = vmatprep.subr.mxu0 0.0
    %657 = vmatpush1.msra.mxu0 0.0
    %658 = vmatprep.subr.mxu0 0.0
    %659 = vmatpush1.msra.mxu0 0.0
    %660 = vmatprep.subr.mxu0 0.0
    %661 = vmatpush1.msra.mxu0 0.0
    %662 = vmatprep.subr.mxu0 0.0
    %663 = vmatpush1.msra.mxu0 0.0
    %664 = vmatprep.subr.mxu0 0.0
    %665 = vmatpush1.msra.mxu0 0.0
    %666 = vmatprep.subr.mxu0 0.0
    %667 = vmatpush1.msra.mxu0 0.0
    %668 = vmatprep.subr.mxu0 0.0
    %669 = vmatpush1.msra.mxu0 0.0
    %670 = vmatprep.subr.mxu0 0.0
    %671 = vmatpush1.msra.mxu0 0.0
    %672 = vmatprep.subr.mxu0 0.0
    %673 = vmatpush1.msra.mxu0 0.0
    %674 = vmatprep.mubr.f32.mxu0 0.0
    %675 = vmatmul.mubr.f32.gmra.mrb[0].mxu0 %v603
    %v676 = vpop.f32.mrb[0].mxu0
    %v677 = vadd.f32 0.0, %v676
    %v678 = vpop.f32.mrb[0].mxu0
    %v679 = vadd.f32 0.0, %v678
    %680 = vdwg.mxu0
    %681 = vmatprep.subr.mxu0 0.0
    %682 = vmatpush1.msra.mxu0 %v50
    %683 = vmatprep.subr.mxu0 0.0
    %684 = vmatpush1.msra.mxu0 %v53
    %685 = vmatprep.subr.mxu0 0.0
    %686 = vmatpush1.msra.mxu0 %v56
    %687 = vmatprep.subr.mxu0 0.0
    %688 = vmatpush1.msra.mxu0 %v59
    %689 = vmatprep.subr.mxu0 0.0
    %690 = vmatpush1.msra.mxu0 %v62
    %691 = vmatprep.subr.mxu0 0.0
    %692 = vmatpush1.msra.mxu0 %v65
    %693 = vmatprep.subr.mxu0 0.0
    %694 = vmatpush1.msra.mxu0 %v68
    %695 = vmatprep.subr.mxu0 0.0
    %696 = vmatpush1.msra.mxu0 %v71
    %697 = vmatprep.subr.mxu0 0.0
    %698 = vmatpush1.msra.mxu0 %v74
    %699 = vmatprep.subr.mxu0 0.0
    %700 = vmatpush1.msra.mxu0 %v77
    %701 = vmatprep.subr.mxu0 0.0
    %702 = vmatpush1.msra.mxu0 %v80
    %703 = vmatprep.subr.mxu0 0.0
    %704 = vmatpush1.msra.mxu0 %v83
    %705 = vmatprep.subr.mxu0 0.0
    %706 = vmatpush1.msra.mxu0 %v86
    %707 = vmatprep.subr.mxu0 0.0
    %708 = vmatpush1.msra.mxu0 %v89
    %709 = vmatprep.subr.mxu0 0.0
    %710 = vmatpush1.msra.mxu0 %v92
    %711 = vmatprep.subr.mxu0 0.0
    %712 = vmatpush1.msra.mxu0 %v95
    %713 = vmatprep.subr.mxu0 0.0
    %714 = vmatpush1.msra.mxu0 0.0
    %715 = vmatprep.subr.mxu0 0.0
    %716 = vmatpush1.msra.mxu0 0.0
    %717 = vmatprep.subr.mxu0 0.0
    %718 = vmatpush1.msra.mxu0 0.0
    %719 = vmatprep.subr.mxu0 0.0
    %720 = vmatpush1.msra.mxu0 0.0
    %721 = vmatprep.subr.mxu0 0.0
    %722 = vmatpush1.msra.mxu0 0.0
    %723 = vmatprep.subr.mxu0 0.0
    %724 = vmatpush1.msra.mxu0 0.0
    %725 = vmatprep.subr.mxu0 0.0
    %726 = vmatpush1.msra.mxu0 0.0
    %727 = vmatprep.subr.mxu0 0.0
    %728 = vmatpush1.msra.mxu0 0.0
    %729 = vmatprep.subr.mxu0 0.0
    %730 = vmatpush1.msra.mxu0 0.0
    %731 = vmatprep.subr.mxu0 0.0
    %732 = vmatpush1.msra.mxu0 0.0
    %733 = vmatprep.subr.mxu0 0.0
    %734 = vmatpush1.msra.mxu0 0.0
    %735 = vmatprep.subr.mxu0 0.0
    %736 = vmatpush1.msra.mxu0 0.0
    %737 = vmatprep.subr.mxu0 0.0
    %738 = vmatpush1.msra.mxu0 0.0
    %739 = vmatprep.subr.mxu0 0.0
    %740 = vmatpush1.msra.mxu0 0.0
    %741 = vmatprep.subr.mxu0 0.0
    %742 = vmatpush1.msra.mxu0 0.0
    %743 = vmatprep.subr.mxu0 0.0
    %744 = vmatpush1.msra.mxu0 0.0
    %745 = vmatprep.mubr.f32.mxu0 0.0
    %746 = vmatmul.mubr.f32.gmra.mrb[0].mxu0 %v603
    %v747 = vpop.f32.mrb[0].mxu0
    %v748 = vadd.f32 0.0, %v747
    %v749 = vpop.f32.mrb[0].mxu0
    %750 = vdwg.mxu0
    %v751 = vadd.f32 %v607, %v677
    %v752 = vxor.u32 %v751, 2147483648
    %v753 = vmul.f32 %v752, 1.442695
    %v754 = vpow.pop %v753
    %v755 = vadd.f32 %v754, 1.0
    %v756 = vrcp.pop %v755
    %v757 = vmul.f32 1.0, %v756
    %v758 = vadd.f32 %v608, %v679
    %v759 = vxor.u32 %v758, 2147483648
    %v760 = vmul.f32 %v759, 1.442695
    %v761 = vpow.pop %v760
    %v762 = vadd.f32 %v761, 1.0
    %v763 = vrcp.pop %v762
    %v764 = vmul.f32 1.0, %v763
    %v765 = vadd.f32 %v748, %v101
    %v766 = vmul.f32 %v757, %v765
    %v767 = vadd.f32 %v609, %v766
    %v768 = vtanh.pop %v767
    %v769 = vsub.f32 %v603, %v768
    %v770 = vmul.f32 %v764, %v769
    %v771 = vadd.f32 %v768, %v770
    %s772 = scalar_lea.vmem [#allocation8], 24
    %773 = vst [vmem:[%s772] sm:$0xff] %v771
    %s774 = scalar_lea.vmem [#allocation3], 96
    %v775 = vld [vmem:[%s774] sm:$0xff]
    %v776 = vld [vmem:[%s774 + $0x8] sm:$0xff]
    %v777 = vld [vmem:[%s774 + $0x10] sm:$0xff]
    %778 = vmatprep.subr.mxu0 %v49
    %779 = vmatpush1.msra.mxu0 %v48
    %780 = vmatprep.subr.mxu0 %v52
    %781 = vmatpush1.msra.mxu0 %v51
    %782 = vmatprep.subr.mxu0 %v55
    %783 = vmatpush1.msra.mxu0 %v54
    %784 = vmatprep.subr.mxu0 %v58
    %785 = vmatpush1.msra.mxu0 %v57
    %786 = vmatprep.subr.mxu0 %v61
    %787 = vmatpush1.msra.mxu0 %v60
    %788 = vmatprep.subr.mxu0 %v64
    %789 = vmatpush1.msra.mxu0 %v63
    %790 = vmatprep.subr.mxu0 %v67
    %791 = vmatpush1.msra.mxu0 %v66
    %792 = vmatprep.subr.mxu0 %v70
    %793 = vmatpush1.msra.mxu0 %v69
    %794 = vmatprep.subr.mxu0 %v73
    %795 = vmatpush1.msra.mxu0 %v72
    %796 = vmatprep.subr.mxu0 %v76
    %797 = vmatpush1.msra.mxu0 %v75
    %798 = vmatprep.subr.mxu0 %v79
    %799 = vmatpush1.msra.mxu0 %v78
    %800 = vmatprep.subr.mxu0 %v82
    %801 = vmatpush1.msra.mxu0 %v81
    %802 = vmatprep.subr.mxu0 %v85
    %803 = vmatpush1.msra.mxu0 %v84
    %804 = vmatprep.subr.mxu0 %v88
    %805 = vmatpush1.msra.mxu0 %v87
    %806 = vmatprep.subr.mxu0 %v91
    %807 = vmatpush1.msra.mxu0 %v90
    %808 = vmatprep.subr.mxu0 %v94
    %809 = vmatpush1.msra.mxu0 %v93
    %810 = vmatprep.subr.mxu0 0.0
    %811 = vmatpush1.msra.mxu0 0.0
    %812 = vmatprep.subr.mxu0 0.0
    %813 = vmatpush1.msra.mxu0 0.0
    %814 = vmatprep.subr.mxu0 0.0
    %815 = vmatpush1.msra.mxu0 0.0
    %816 = vmatprep.subr.mxu0 0.0
    %817 = vmatpush1.msra.mxu0 0.0
    %818 = vmatprep.subr.mxu0 0.0
    %819 = vmatpush1.msra.mxu0 0.0
    %820 = vmatprep.subr.mxu0 0.0
    %821 = vmatpush1.msra.mxu0 0.0
    %822 = vmatprep.subr.mxu0 0.0
    %823 = vmatpush1.msra.mxu0 0.0
    %824 = vmatprep.subr.mxu0 0.0
    %825 = vmatpush1.msra.mxu0 0.0
    %826 = vmatprep.subr.mxu0 0.0
    %827 = vmatpush1.msra.mxu0 0.0
    %828 = vmatprep.subr.mxu0 0.0
    %829 = vmatpush1.msra.mxu0 0.0
    %830 = vmatprep.subr.mxu0 0.0
    %831 = vmatpush1.msra.mxu0 0.0
    %832 = vmatprep.subr.mxu0 0.0
    %833 = vmatpush1.msra.mxu0 0.0
    %834 = vmatprep.subr.mxu0 0.0
    %835 = vmatpush1.msra.mxu0 0.0
    %836 = vmatprep.subr.mxu0 0.0
    %837 = vmatpush1.msra.mxu0 0.0
    %838 = vmatprep.subr.mxu0 0.0
    %839 = vmatpush1.msra.mxu0 0.0
    %840 = vmatprep.subr.mxu0 0.0
    %841 = vmatpush1.msra.mxu0 0.0
    %842 = vmatprep.mubr.f32.mxu0 0.0
    %843 = vmatmul.mubr.f32.gmra.mrb[0].mxu0 %v771
    %v844 = vpop.f32.mrb[0].mxu0
    %v845 = vadd.f32 0.0, %v844
    %v846 = vpop.f32.mrb[0].mxu0
    %v847 = vadd.f32 0.0, %v846
    %848 = vdwg.mxu0
    %849 = vmatprep.subr.mxu0 0.0
    %850 = vmatpush1.msra.mxu0 %v50
    %851 = vmatprep.subr.mxu0 0.0
    %852 = vmatpush1.msra.mxu0 %v53
    %853 = vmatprep.subr.mxu0 0.0
    %854 = vmatpush1.msra.mxu0 %v56
    %855 = vmatprep.subr.mxu0 0.0
    %856 = vmatpush1.msra.mxu0 %v59
    %857 = vmatprep.subr.mxu0 0.0
    %858 = vmatpush1.msra.mxu0 %v62
    %859 = vmatprep.subr.mxu0 0.0
    %860 = vmatpush1.msra.mxu0 %v65
    %861 = vmatprep.subr.mxu0 0.0
    %862 = vmatpush1.msra.mxu0 %v68
    %863 = vmatprep.subr.mxu0 0.0
    %864 = vmatpush1.msra.mxu0 %v71
    %865 = vmatprep.subr.mxu0 0.0
    %866 = vmatpush1.msra.mxu0 %v74
    %867 = vmatprep.subr.mxu0 0.0
    %868 = vmatpush1.msra.mxu0 %v77
    %869 = vmatprep.subr.mxu0 0.0
    %870 = vmatpush1.msra.mxu0 %v80
    %871 = vmatprep.subr.mxu0 0.0
    %872 = vmatpush1.msra.mxu0 %v83
    %873 = vmatprep.subr.mxu0 0.0
    %874 = vmatpush1.msra.mxu0 %v86
    %875 = vmatprep.subr.mxu0 0.0
    %876 = vmatpush1.msra.mxu0 %v89
    %877 = vmatprep.subr.mxu0 0.0
    %878 = vmatpush1.msra.mxu0 %v92
    %879 = vmatprep.subr.mxu0 0.0
    %880 = vmatpush1.msra.mxu0 %v95
    %881 = vmatprep.subr.mxu0 0.0
    %882 = vmatpush1.msra.mxu0 0.0
    %883 = vmatprep.subr.mxu0 0.0
    %884 = vmatpush1.msra.mxu0 0.0
    %885 = vmatprep.subr.mxu0 0.0
    %886 = vmatpush1.msra.mxu0 0.0
    %887 = vmatprep.subr.mxu0 0.0
    %888 = vmatpush1.msra.mxu0 0.0
    %889 = vmatprep.subr.mxu0 0.0
    %890 = vmatpush1.msra.mxu0 0.0
    %891 = vmatprep.subr.mxu0 0.0
    %892 = vmatpush1.msra.mxu0 0.0
    %893 = vmatprep.subr.mxu0 0.0
    %894 = vmatpush1.msra.mxu0 0.0
    %895 = vmatprep.subr.mxu0 0.0
    %896 = vmatpush1.msra.mxu0 0.0
    %897 = vmatprep.subr.mxu0 0.0
    %898 = vmatpush1.msra.mxu0 0.0
    %899 = vmatprep.subr.mxu0 0.0
    %900 = vmatpush1.msra.mxu0 0.0
    %901 = vmatprep.subr.mxu0 0.0
    %902 = vmatpush1.msra.mxu0 0.0
    %903 = vmatprep.subr.mxu0 0.0
    %904 = vmatpush1.msra.mxu0 0.0
    %905 = vmatprep.subr.mxu0 0.0
    %906 = vmatpush1.msra.mxu0 0.0
    %907 = vmatprep.subr.mxu0 0.0
    %908 = vmatpush1.msra.mxu0 0.0
    %909 = vmatprep.subr.mxu0 0.0
    %910 = vmatpush1.msra.mxu0 0.0
    %911 = vmatprep.subr.mxu0 0.0
    %912 = vmatpush1.msra.mxu0 0.0
    %913 = vmatprep.mubr.f32.mxu0 0.0
    %914 = vmatmul.mubr.f32.gmra.mrb[0].mxu0 %v771
    %v915 = vpop.f32.mrb[0].mxu0
    %v916 = vadd.f32 0.0, %v915
    %v917 = vpop.f32.mrb[0].mxu0
    %918 = vdwg.mxu0
    %v919 = vadd.f32 %v775, %v845
    %v920 = vxor.u32 %v919, 2147483648
    %v921 = vmul.f32 %v920, 1.442695
    %v922 = vpow.pop %v921
    %v923 = vadd.f32 %v922, 1.0
    %v924 = vrcp.pop %v923
    %v925 = vmul.f32 1.0, %v924
    %v926 = vadd.f32 %v776, %v847
    %v927 = vxor.u32 %v926, 2147483648
    %v928 = vmul.f32 %v927, 1.442695
    %v929 = vpow.pop %v928
    %v930 = vadd.f32 %v929, 1.0
    %v931 = vrcp.pop %v930
    %v932 = vmul.f32 1.0, %v931
    %v933 = vadd.f32 %v916, %v101
    %v934 = vmul.f32 %v925, %v933
    %v935 = vadd.f32 %v777, %v934
    %v936 = vtanh.pop %v935
    %v937 = vsub.f32 %v771, %v936
    %v938 = vmul.f32 %v932, %v937
    %v939 = vadd.f32 %v936, %v938
    %s940 = scalar_lea.vmem [#allocation8], 32
    %941 = vst [vmem:[%s940] sm:$0xff] %v939
    %s942 = scalar_lea.vmem [#allocation3], 120
    %v943 = vld [vmem:[%s942] sm:$0xff]
    %v944 = vld [vmem:[%s942 + $0x8] sm:$0xff]
    %v945 = vld [vmem:[%s942 + $0x10] sm:$0xff]
    %946 = vmatprep.subr.mxu0 %v49
    %947 = vmatpush1.msra.mxu0 %v48
    %948 = vmatprep.subr.mxu0 %v52
    %949 = vmatpush1.msra.mxu0 %v51
    %950 = vmatprep.subr.mxu0 %v55
    %951 = vmatpush1.msra.mxu0 %v54
    %952 = vmatprep.subr.mxu0 %v58
    %953 = vmatpush1.msra.mxu0 %v57
    %954 = vmatprep.subr.mxu0 %v61
    %955 = vmatpush1.msra.mxu0 %v60
    %956 = vmatprep.subr.mxu0 %v64
    %957 = vmatpush1.msra.mxu0 %v63
    %958 = vmatprep.subr.mxu0 %v67
    %959 = vmatpush1.msra.mxu0 %v66
    %960 = vmatprep.subr.mxu0 %v70
    %961 = vmatpush1.msra.mxu0 %v69
    %962 = vmatprep.subr.mxu0 %v73
    %963 = vmatpush1.msra.mxu0 %v72
    %964 = vmatprep.subr.mxu0 %v76
    %965 = vmatpush1.msra.mxu0 %v75
    %966 = vmatprep.subr.mxu0 %v79
    %967 = vmatpush1.msra.mxu0 %v78
    %968 = vmatprep.subr.mxu0 %v82
    %969 = vmatpush1.msra.mxu0 %v81
    %970 = vmatprep.subr.mxu0 %v85
    %971 = vmatpush1.msra.mxu0 %v84
    %972 = vmatprep.subr.mxu0 %v88
    %973 = vmatpush1.msra.mxu0 %v87
    %974 = vmatprep.subr.mxu0 %v91
    %975 = vmatpush1.msra.mxu0 %v90
    %976 = vmatprep.subr.mxu0 %v94
    %977 = vmatpush1.msra.mxu0 %v93
    %978 = vmatprep.subr.mxu0 0.0
    %979 = vmatpush1.msra.mxu0 0.0
    %980 = vmatprep.subr.mxu0 0.0
    %981 = vmatpush1.msra.mxu0 0.0
    %982 = vmatprep.subr.mxu0 0.0
    %983 = vmatpush1.msra.mxu0 0.0
    %984 = vmatprep.subr.mxu0 0.0
    %985 = vmatpush1.msra.mxu0 0.0
    %986 = vmatprep.subr.mxu0 0.0
    %987 = vmatpush1.msra.mxu0 0.0
    %988 = vmatprep.subr.mxu0 0.0
    %989 = vmatpush1.msra.mxu0 0.0
    %990 = vmatprep.subr.mxu0 0.0
    %991 = vmatpush1.msra.mxu0 0.0
    %992 = vmatprep.subr.mxu0 0.0
    %993 = vmatpush1.msra.mxu0 0.0
    %994 = vmatprep.subr.mxu0 0.0
    %995 = vmatpush1.msra.mxu0 0.0
    %996 = vmatprep.subr.mxu0 0.0
    %997 = vmatpush1.msra.mxu0 0.0
    %998 = vmatprep.subr.mxu0 0.0
    %999 = vmatpush1.msra.mxu0 0.0
    %1000 = vmatprep.subr.mxu0 0.0
    %1001 = vmatpush1.msra.mxu0 0.0
    %1002 = vmatprep.subr.mxu0 0.0
    %1003 = vmatpush1.msra.mxu0 0.0
    %1004 = vmatprep.subr.mxu0 0.0
    %1005 = vmatpush1.msra.mxu0 0.0
    %1006 = vmatprep.subr.mxu0 0.0
    %1007 = vmatpush1.msra.mxu0 0.0
    %1008 = vmatprep.subr.mxu0 0.0
    %1009 = vmatpush1.msra.mxu0 0.0
    %1010 = vmatprep.mubr.f32.mxu0 0.0
    %1011 = vmatmul.mubr.f32.gmra.mrb[0].mxu0 %v939
    %v1012 = vpop.f32.mrb[0].mxu0
    %v1013 = vadd.f32 0.0, %v1012
    %v1014 = vpop.f32.mrb[0].mxu0
    %v1015 = vadd.f32 0.0, %v1014
    %1016 = vdwg.mxu0
    %1017 = vmatprep.subr.mxu0 0.0
    %1018 = vmatpush1.msra.mxu0 %v50
    %1019 = vmatprep.subr.mxu0 0.0
    %1020 = vmatpush1.msra.mxu0 %v53
    %1021 = vmatprep.subr.mxu0 0.0
    %1022 = vmatpush1.msra.mxu0 %v56
    %1023 = vmatprep.subr.mxu0 0.0
    %1024 = vmatpush1.msra.mxu0 %v59
    %1025 = vmatprep.subr.mxu0 0.0
    %1026 = vmatpush1.msra.mxu0 %v62
    %1027 = vmatprep.subr.mxu0 0.0
    %1028 = vmatpush1.msra.mxu0 %v65
    %1029 = vmatprep.subr.mxu0 0.0
    %1030 = vmatpush1.msra.mxu0 %v68
    %1031 = vmatprep.subr.mxu0 0.0
    %1032 = vmatpush1.msra.mxu0 %v71
    %1033 = vmatprep.subr.mxu0 0.0
    %1034 = vmatpush1.msra.mxu0 %v74
    %1035 = vmatprep.subr.mxu0 0.0
    %1036 = vmatpush1.msra.mxu0 %v77
    %1037 = vmatprep.subr.mxu0 0.0
    %1038 = vmatpush1.msra.mxu0 %v80
    %1039 = vmatprep.subr.mxu0 0.0
    %1040 = vmatpush1.msra.mxu0 %v83
    %1041 = vmatprep.subr.mxu0 0.0
    %1042 = vmatpush1.msra.mxu0 %v86
    %1043 = vmatprep.subr.mxu0 0.0
    %1044 = vmatpush1.msra.mxu0 %v89
    %1045 = vmatprep.subr.mxu0 0.0
    %1046 = vmatpush1.msra.mxu0 %v92
    %1047 = vmatprep.subr.mxu0 0.0
    %1048 = vmatpush1.msra.mxu0 %v95
    %1049 = vmatprep.subr.mxu0 0.0
    %1050 = vmatpush1.msra.mxu0 0.0
    %1051 = vmatprep.subr.mxu0 0.0
    %1052 = vmatpush1.msra.mxu0 0.0
    %1053 = vmatprep.subr.mxu0 0.0
    %1054 = vmatpush1.msra.mxu0 0.0
    %1055 = vmatprep.subr.mxu0 0.0
    %1056 = vmatpush1.msra.mxu0 0.0
    %1057 = vmatprep.subr.mxu0 0.0
    %1058 = vmatpush1.msra.mxu0 0.0
    %1059 = vmatprep.subr.mxu0 0.0
    %1060 = vmatpush1.msra.mxu0 0.0
    %1061 = vmatprep.subr.mxu0 0.0
    %1062 = vmatpush1.msra.mxu0 0.0
    %1063 = vmatprep.subr.mxu0 0.0
    %1064 = vmatpush1.msra.mxu0 0.0
    %1065 = vmatprep.subr.mxu0 0.0
    %1066 = vmatpush1.msra.mxu0 0.0
    %1067 = vmatprep.subr.mxu0 0.0
    %1068 = vmatpush1.msra.mxu0 0.0
    %1069 = vmatprep.subr.mxu0 0.0
    %1070 = vmatpush1.msra.mxu0 0.0
    %1071 = vmatprep.subr.mxu0 0.0
    %1072 = vmatpush1.msra.mxu0 0.0
    %1073 = vmatprep.subr.mxu0 0.0
    %1074 = vmatpush1.msra.mxu0 0.0
    %1075 = vmatprep.subr.mxu0 0.0
    %1076 = vmatpush1.msra.mxu0 0.0
    %1077 = vmatprep.subr.mxu0 0.0
    %1078 = vmatpush1.msra.mxu0 0.0
    %1079 = vmatprep.subr.mxu0 0.0
    %1080 = vmatpush1.msra.mxu0 0.0
    %1081 = vmatprep.mubr.f32.mxu0 0.0
    %1082 = vmatmul.mubr.f32.gmra.mrb[0].mxu0 %v939
    %v1083 = vpop.f32.mrb[0].mxu0
    %v1084 = vadd.f32 0.0, %v1083
    %v1085 = vpop.f32.mrb[0].mxu0
    %1086 = vdwg.mxu0
    %v1087 = vadd.f32 %v943, %v1013
    %v1088 = vxor.u32 %v1087, 2147483648
    %v1089 = vmul.f32 %v1088, 1.442695
    %v1090 = vpow.pop %v1089
    %v1091 = vadd.f32 %v1090, 1.0
    %v1092 = vrcp.pop %v1091
    %v1093 = vmul.f32 1.0, %v1092
    %v1094 = vadd.f32 %v944, %v1015
    %v1095 = vxor.u32 %v1094, 2147483648
    %v1096 = vmul.f32 %v1095, 1.442695
    %v1097 = vpow.pop %v1096
    %v1098 = vadd.f32 %v1097, 1.0
    %v1099 = vrcp.pop %v1098
    %v1100 = vmul.f32 1.0, %v1099
    %v1101 = vadd.f32 %v1084, %v101
    %v1102 = vmul.f32 %v1093, %v1101
    %v1103 = vadd.f32 %v945, %v1102
    %v1104 = vtanh.pop %v1103
    %v1105 = vsub.f32 %v939, %v1104
    %v1106 = vmul.f32 %v1100, %v1105
    %v1107 = vadd.f32 %v1104, %v1106
    %s1108 = scalar_lea.vmem [#allocation8], 40
    %1109 = vst [vmem:[%s1108] sm:$0xff] %v1107
    %s1110 = scalar_lea.vmem [#allocation3], 144
    %v1111 = vld [vmem:[%s1110] sm:$0xff]
    %v1112 = vld [vmem:[%s1110 + $0x8] sm:$0xff]
    %v1113 = vld [vmem:[%s1110 + $0x10] sm:$0xff]
    %1114 = vmatprep.subr.mxu0 %v49
    %1115 = vmatpush1.msra.mxu0 %v48
    %1116 = vmatprep.subr.mxu0 %v52
    %1117 = vmatpush1.msra.mxu0 %v51
    %1118 = vmatprep.subr.mxu0 %v55
    %1119 = vmatpush1.msra.mxu0 %v54
    %1120 = vmatprep.subr.mxu0 %v58
    %1121 = vmatpush1.msra.mxu0 %v57
    %1122 = vmatprep.subr.mxu0 %v61
    %1123 = vmatpush1.msra.mxu0 %v60
    %1124 = vmatprep.subr.mxu0 %v64
    %1125 = vmatpush1.msra.mxu0 %v63
    %1126 = vmatprep.subr.mxu0 %v67
    %1127 = vmatpush1.msra.mxu0 %v66
    %1128 = vmatprep.subr.mxu0 %v70
    %1129 = vmatpush1.msra.mxu0 %v69
    %1130 = vmatprep.subr.mxu0 %v73
    %1131 = vmatpush1.msra.mxu0 %v72
    %1132 = vmatprep.subr.mxu0 %v76
    %1133 = vmatpush1.msra.mxu0 %v75
    %1134 = vmatprep.subr.mxu0 %v79
    %1135 = vmatpush1.msra.mxu0 %v78
    %1136 = vmatprep.subr.mxu0 %v82
    %1137 = vmatpush1.msra.mxu0 %v81
    %1138 = vmatprep.subr.mxu0 %v85
    %1139 = vmatpush1.msra.mxu0 %v84
    %1140 = vmatprep.subr.mxu0 %v88
    %1141 = vmatpush1.msra.mxu0 %v87
    %1142 = vmatprep.subr.mxu0 %v91
    %1143 = vmatpush1.msra.mxu0 %v90
    %1144 = vmatprep.subr.mxu0 %v94
    %1145 = vmatpush1.msra.mxu0 %v93
    %1146 = vmatprep.subr.mxu0 0.0
    %1147 = vmatpush1.msra.mxu0 0.0
    %1148 = vmatprep.subr.mxu0 0.0
    %1149 = vmatpush1.msra.mxu0 0.0
    %1150 = vmatprep.subr.mxu0 0.0
    %1151 = vmatpush1.msra.mxu0 0.0
    %1152 = vmatprep.subr.mxu0 0.0
    %1153 = vmatpush1.msra.mxu0 0.0
    %1154 = vmatprep.subr.mxu0 0.0
    %1155 = vmatpush1.msra.mxu0 0.0
    %1156 = vmatprep.subr.mxu0 0.0
    %1157 = vmatpush1.msra.mxu0 0.0
    %1158 = vmatprep.subr.mxu0 0.0
    %1159 = vmatpush1.msra.mxu0 0.0
    %1160 = vmatprep.subr.mxu0 0.0
    %1161 = vmatpush1.msra.mxu0 0.0
    %1162 = vmatprep.subr.mxu0 0.0
    %1163 = vmatpush1.msra.mxu0 0.0
    %1164 = vmatprep.subr.mxu0 0.0
    %1165 = vmatpush1.msra.mxu0 0.0
    %1166 = vmatprep.subr.mxu0 0.0
    %1167 = vmatpush1.msra.mxu0 0.0
    %1168 = vmatprep.subr.mxu0 0.0
    %1169 = vmatpush1.msra.mxu0 0.0
    %1170 = vmatprep.subr.mxu0 0.0
    %1171 = vmatpush1.msra.mxu0 0.0
    %1172 = vmatprep.subr.mxu0 0.0
    %1173 = vmatpush1.msra.mxu0 0.0
    %1174 = vmatprep.subr.mxu0 0.0
    %1175 = vmatpush1.msra.mxu0 0.0
    %1176 = vmatprep.subr.mxu0 0.0
    %1177 = vmatpush1.msra.mxu0 0.0
    %1178 = vmatprep.mubr.f32.mxu0 0.0
    %1179 = vmatmul.mubr.f32.gmra.mrb[0].mxu0 %v1107
    %v1180 = vpop.f32.mrb[0].mxu0
    %v1181 = vadd.f32 0.0, %v1180
    %v1182 = vpop.f32.mrb[0].mxu0
    %v1183 = vadd.f32 0.0, %v1182
    %1184 = vdwg.mxu0
    %1185 = vmatprep.subr.mxu0 0.0
    %1186 = vmatpush1.msra.mxu0 %v50
    %1187 = vmatprep.subr.mxu0 0.0
    %1188 = vmatpush1.msra.mxu0 %v53
    %1189 = vmatprep.subr.mxu0 0.0
    %1190 = vmatpush1.msra.mxu0 %v56
    %1191 = vmatprep.subr.mxu0 0.0
    %1192 = vmatpush1.msra.mxu0 %v59
    %1193 = vmatprep.subr.mxu0 0.0
    %1194 = vmatpush1.msra.mxu0 %v62
    %1195 = vmatprep.subr.mxu0 0.0
    %1196 = vmatpush1.msra.mxu0 %v65
    %1197 = vmatprep.subr.mxu0 0.0
    %1198 = vmatpush1.msra.mxu0 %v68
    %1199 = vmatprep.subr.mxu0 0.0
    %1200 = vmatpush1.msra.mxu0 %v71
    %1201 = vmatprep.subr.mxu0 0.0
    %1202 = vmatpush1.msra.mxu0 %v74
    %1203 = vmatprep.subr.mxu0 0.0
    %1204 = vmatpush1.msra.mxu0 %v77
    %1205 = vmatprep.subr.mxu0 0.0
    %1206 = vmatpush1.msra.mxu0 %v80
    %1207 = vmatprep.subr.mxu0 0.0
    %1208 = vmatpush1.msra.mxu0 %v83
    %1209 = vmatprep.subr.mxu0 0.0
    %1210 = vmatpush1.msra.mxu0 %v86
    %1211 = vmatprep.subr.mxu0 0.0
    %1212 = vmatpush1.msra.mxu0 %v89
    %1213 = vmatprep.subr.mxu0 0.0
    %1214 = vmatpush1.msra.mxu0 %v92
    %1215 = vmatprep.subr.mxu0 0.0
    %1216 = vmatpush1.msra.mxu0 %v95
    %1217 = vmatprep.subr.mxu0 0.0
    %1218 = vmatpush1.msra.mxu0 0.0
    %1219 = vmatprep.subr.mxu0 0.0
    %1220 = vmatpush1.msra.mxu0 0.0
    %1221 = vmatprep.subr.mxu0 0.0
    %1222 = vmatpush1.msra.mxu0 0.0
    %1223 = vmatprep.subr.mxu0 0.0
    %1224 = vmatpush1.msra.mxu0 0.0
    %1225 = vmatprep.subr.mxu0 0.0
    %1226 = vmatpush1.msra.mxu0 0.0
    %1227 = vmatprep.subr.mxu0 0.0
    %1228 = vmatpush1.msra.mxu0 0.0
    %1229 = vmatprep.subr.mxu0 0.0
    %1230 = vmatpush1.msra.mxu0 0.0
    %1231 = vmatprep.subr.mxu0 0.0
    %1232 = vmatpush1.msra.mxu0 0.0
    %1233 = vmatprep.subr.mxu0 0.0
    %1234 = vmatpush1.msra.mxu0 0.0
    %1235 = vmatprep.subr.mxu0 0.0
    %1236 = vmatpush1.msra.mxu0 0.0
    %1237 = vmatprep.subr.mxu0 0.0
    %1238 = vmatpush1.msra.mxu0 0.0
    %1239 = vmatprep.subr.mxu0 0.0
    %1240 = vmatpush1.msra.mxu0 0.0
    %1241 = vmatprep.subr.mxu0 0.0
    %1242 = vmatpush1.msra.mxu0 0.0
    %1243 = vmatprep.subr.mxu0 0.0
    %1244 = vmatpush1.msra.mxu0 0.0
    %1245 = vmatprep.subr.mxu0 0.0
    %1246 = vmatpush1.msra.mxu0 0.0
    %1247 = vmatprep.subr.mxu0 0.0
    %1248 = vmatpush1.msra.mxu0 0.0
    %1249 = vmatprep.mubr.f32.mxu0 0.0
    %1250 = vmatmul.mubr.f32.gmra.mrb[0].mxu0 %v1107
    %v1251 = vpop.f32.mrb[0].mxu0
    %v1252 = vadd.f32 0.0, %v1251
    %v1253 = vpop.f32.mrb[0].mxu0
    %1254 = vdwg.mxu0
    %v1255 = vadd.f32 %v1111, %v1181
    %v1256 = vxor.u32 %v1255, 2147483648
    %v1257 = vmul.f32 %v1256, 1.442695
    %v1258 = vpow.pop %v1257
    %v1259 = vadd.f32 %v1258, 1.0
    %v1260 = vrcp.pop %v1259
    %v1261 = vmul.f32 1.0, %v1260
    %v1262 = vadd.f32 %v1112, %v1183
    %v1263 = vxor.u32 %v1262, 2147483648
    %v1264 = vmul.f32 %v1263, 1.442695
    %v1265 = vpow.pop %v1264
    %v1266 = vadd.f32 %v1265, 1.0
    %v1267 = vrcp.pop %v1266
    %v1268 = vmul.f32 1.0, %v1267
    %v1269 = vadd.f32 %v1252, %v101
    %v1270 = vmul.f32 %v1261, %v1269
    %v1271 = vadd.f32 %v1113, %v1270
    %v1272 = vtanh.pop %v1271
    %v1273 = vsub.f32 %v1107, %v1272
    %v1274 = vmul.f32 %v1268, %v1273
    %v1275 = vadd.f32 %v1272, %v1274
    %s1276 = scalar_lea.vmem [#allocation8], 48
    %1277 = vst [vmem:[%s1276] sm:$0xff] %v1275
    %s1278 = scalar_lea.vmem [#allocation3], 168
    %v1279 = vld [vmem:[%s1278] sm:$0xff]
    %v1280 = vld [vmem:[%s1278 + $0x8] sm:$0xff]
    %v1281 = vld [vmem:[%s1278 + $0x10] sm:$0xff]
    %1282 = vmatprep.subr.mxu0 %v49
    %1283 = vmatpush1.msra.mxu0 %v48
    %1284 = vmatprep.subr.mxu0 %v52
    %1285 = vmatpush1.msra.mxu0 %v51
    %1286 = vmatprep.subr.mxu0 %v55
    %1287 = vmatpush1.msra.mxu0 %v54
    %1288 = vmatprep.subr.mxu0 %v58
    %1289 = vmatpush1.msra.mxu0 %v57
    %1290 = vmatprep.subr.mxu0 %v61
    %1291 = vmatpush1.msra.mxu0 %v60
    %1292 = vmatprep.subr.mxu0 %v64
    %1293 = vmatpush1.msra.mxu0 %v63
    %1294 = vmatprep.subr.mxu0 %v67
    %1295 = vmatpush1.msra.mxu0 %v66
    %1296 = vmatprep.subr.mxu0 %v70
    %1297 = vmatpush1.msra.mxu0 %v69
    %1298 = vmatprep.subr.mxu0 %v73
    %1299 = vmatpush1.msra.mxu0 %v72
    %1300 = vmatprep.subr.mxu0 %v76
    %1301 = vmatpush1.msra.mxu0 %v75
    %1302 = vmatprep.subr.mxu0 %v79
    %1303 = vmatpush1.msra.mxu0 %v78
    %1304 = vmatprep.subr.mxu0 %v82
    %1305 = vmatpush1.msra.mxu0 %v81
    %1306 = vmatprep.subr.mxu0 %v85
    %1307 = vmatpush1.msra.mxu0 %v84
    %1308 = vmatprep.subr.mxu0 %v88
    %1309 = vmatpush1.msra.mxu0 %v87
    %1310 = vmatprep.subr.mxu0 %v91
    %1311 = vmatpush1.msra.mxu0 %v90
    %1312 = vmatprep.subr.mxu0 %v94
    %1313 = vmatpush1.msra.mxu0 %v93
    %1314 = vmatprep.subr.mxu0 0.0
    %1315 = vmatpush1.msra.mxu0 0.0
    %1316 = vmatprep.subr.mxu0 0.0
    %1317 = vmatpush1.msra.mxu0 0.0
    %1318 = vmatprep.subr.mxu0 0.0
    %1319 = vmatpush1.msra.mxu0 0.0
    %1320 = vmatprep.subr.mxu0 0.0
    %1321 = vmatpush1.msra.mxu0 0.0
    %1322 = vmatprep.subr.mxu0 0.0
    %1323 = vmatpush1.msra.mxu0 0.0
    %1324 = vmatprep.subr.mxu0 0.0
    %1325 = vmatpush1.msra.mxu0 0.0
    %1326 = vmatprep.subr.mxu0 0.0
    %1327 = vmatpush1.msra.mxu0 0.0
    %1328 = vmatprep.subr.mxu0 0.0
    %1329 = vmatpush1.msra.mxu0 0.0
    %1330 = vmatprep.subr.mxu0 0.0
    %1331 = vmatpush1.msra.mxu0 0.0
    %1332 = vmatprep.subr.mxu0 0.0
    %1333 = vmatpush1.msra.mxu0 0.0
    %1334 = vmatprep.subr.mxu0 0.0
    %1335 = vmatpush1.msra.mxu0 0.0
    %1336 = vmatprep.subr.mxu0 0.0
    %1337 = vmatpush1.msra.mxu0 0.0
    %1338 = vmatprep.subr.mxu0 0.0
    %1339 = vmatpush1.msra.mxu0 0.0
    %1340 = vmatprep.subr.mxu0 0.0
    %1341 = vmatpush1.msra.mxu0 0.0
    %1342 = vmatprep.subr.mxu0 0.0
    %1343 = vmatpush1.msra.mxu0 0.0
    %1344 = vmatprep.subr.mxu0 0.0
    %1345 = vmatpush1.msra.mxu0 0.0
    %1346 = vmatprep.mubr.f32.mxu0 0.0
    %1347 = vmatmul.mubr.f32.gmra.mrb[0].mxu0 %v1275
    %v1348 = vpop.f32.mrb[0].mxu0
    %v1349 = vadd.f32 0.0, %v1348
    %v1350 = vpop.f32.mrb[0].mxu0
    %v1351 = vadd.f32 0.0, %v1350
    %1352 = vdwg.mxu0
    %1353 = vmatprep.subr.mxu0 0.0
    %1354 = vmatpush1.msra.mxu0 %v50
    %1355 = vmatprep.subr.mxu0 0.0
    %1356 = vmatpush1.msra.mxu0 %v53
    %1357 = vmatprep.subr.mxu0 0.0
    %1358 = vmatpush1.msra.mxu0 %v56
    %1359 = vmatprep.subr.mxu0 0.0
    %1360 = vmatpush1.msra.mxu0 %v59
    %1361 = vmatprep.subr.mxu0 0.0
    %1362 = vmatpush1.msra.mxu0 %v62
    %1363 = vmatprep.subr.mxu0 0.0
    %1364 = vmatpush1.msra.mxu0 %v65
    %1365 = vmatprep.subr.mxu0 0.0
    %1366 = vmatpush1.msra.mxu0 %v68
    %1367 = vmatprep.subr.mxu0 0.0
    %1368 = vmatpush1.msra.mxu0 %v71
    %1369 = vmatprep.subr.mxu0 0.0
    %1370 = vmatpush1.msra.mxu0 %v74
    %1371 = vmatprep.subr.mxu0 0.0
    %1372 = vmatpush1.msra.mxu0 %v77
    %1373 = vmatprep.subr.mxu0 0.0
    %1374 = vmatpush1.msra.mxu0 %v80
    %1375 = vmatprep.subr.mxu0 0.0
    %1376 = vmatpush1.msra.mxu0 %v83
    %1377 = vmatprep.subr.mxu0 0.0
    %1378 = vmatpush1.msra.mxu0 %v86
    %1379 = vmatprep.subr.mxu0 0.0
    %1380 = vmatpush1.msra.mxu0 %v89
    %1381 = vmatprep.subr.mxu0 0.0
    %1382 = vmatpush1.msra.mxu0 %v92
    %1383 = vmatprep.subr.mxu0 0.0
    %1384 = vmatpush1.msra.mxu0 %v95
    %1385 = vmatprep.subr.mxu0 0.0
    %1386 = vmatpush1.msra.mxu0 0.0
    %1387 = vmatprep.subr.mxu0 0.0
    %1388 = vmatpush1.msra.mxu0 0.0
    %1389 = vmatprep.subr.mxu0 0.0
    %1390 = vmatpush1.msra.mxu0 0.0
    %1391 = vmatprep.subr.mxu0 0.0
    %1392 = vmatpush1.msra.mxu0 0.0
    %1393 = vmatprep.subr.mxu0 0.0
    %1394 = vmatpush1.msra.mxu0 0.0
    %1395 = vmatprep.subr.mxu0 0.0
    %1396 = vmatpush1.msra.mxu0 0.0
    %1397 = vmatprep.subr.mxu0 0.0
    %1398 = vmatpush1.msra.mxu0 0.0
    %1399 = vmatprep.subr.mxu0 0.0
    %1400 = vmatpush1.msra.mxu0 0.0
    %1401 = vmatprep.subr.mxu0 0.0
    %1402 = vmatpush1.msra.mxu0 0.0
    %1403 = vmatprep.subr.mxu0 0.0
    %1404 = vmatpush1.msra.mxu0 0.0
    %1405 = vmatprep.subr.mxu0 0.0
    %1406 = vmatpush1.msra.mxu0 0.0
    %1407 = vmatprep.subr.mxu0 0.0
    %1408 = vmatpush1.msra.mxu0 0.0
    %1409 = vmatprep.subr.mxu0 0.0
    %1410 = vmatpush1.msra.mxu0 0.0
    %1411 = vmatprep.subr.mxu0 0.0
    %1412 = vmatpush1.msra.mxu0 0.0
    %1413 = vmatprep.subr.mxu0 0.0
    %1414 = vmatpush1.msra.mxu0 0.0
    %1415 = vmatprep.subr.mxu0 0.0
    %1416 = vmatpush1.msra.mxu0 0.0
    %1417 = vmatprep.mubr.f32.mxu0 0.0
    %1418 = vmatmul.mubr.f32.gmra.mrb[0].mxu0 %v1275
    %v1419 = vpop.f32.mrb[0].mxu0
    %v1420 = vadd.f32 0.0, %v1419
    %v1421 = vpop.f32.mrb[0].mxu0
    %1422 = vdwg.mxu0
    %v1423 = vadd.f32 %v1279, %v1349
    %v1424 = vxor.u32 %v1423, 2147483648
    %v1425 = vmul.f32 %v1424, 1.442695
    %v1426 = vpow.pop %v1425
    %v1427 = vadd.f32 %v1426, 1.0
    %v1428 = vrcp.pop %v1427
    %v1429 = vmul.f32 1.0, %v1428
    %v1430 = vadd.f32 %v1280, %v1351
    %v1431 = vxor.u32 %v1430, 2147483648
    %v1432 = vmul.f32 %v1431, 1.442695
    %v1433 = vpow.pop %v1432
    %v1434 = vadd.f32 %v1433, 1.0
    %v1435 = vrcp.pop %v1434
    %v1436 = vmul.f32 1.0, %v1435
    %v1437 = vadd.f32 %v1420, %v101
    %v1438 = vmul.f32 %v1429, %v1437
    %v1439 = vadd.f32 %v1281, %v1438
    %v1440 = vtanh.pop %v1439
    %v1441 = vsub.f32 %v1275, %v1440
    %v1442 = vmul.f32 %v1436, %v1441
    %v1443 = vadd.f32 %v1440, %v1442
    %s1444 = scalar_lea.vmem [#allocation8], 56
    %1445 = vst [vmem:[%s1444] sm:$0xff] %v1443
    %1446 = vst [vmem:[#allocation2] sm:$0xff] %v1443
    // Predicated region
    $region26: #{tpu_custom_call.1} parent=1 // pred_check
      _
    $region27: #{tpu_custom_call.1} parent=1 // pred_check_branch
      %1448 = sbr.rel (0) target = $region29
    $region28: #{tpu_custom_call.1} parent=1 // pred_region
      %s1450 = ssub.s32 1024, 1024
      %1451 = vsyncadd [#allocation5], %s1450
      %s1452 = sshll.u32 [#allocation8], 4
      %s1453 = int_to_ptr.vmem [resolvable:$true] %s1452
      %1458 = dma.vmem_to_hbm [thread:$0]  %s1453, 1024, %s3, [#allocation5], 128, 128, 8
    $region29: #{tpu_custom_call.1} parent=1 // pred_fallthru
      _
    // Predicated region
    $region30: #{tpu_custom_call.1} parent=1 // pred_check
      _
    $region31: #{tpu_custom_call.1} parent=1 // pred_check_branch
      %1460 = sbr.rel (0) target = $region33
    $region32: #{tpu_custom_call.1} parent=1 // pred_region
      %1461 = dma.done [#allocation5], 1024
    $region33: #{tpu_custom_call.1} parent=1 // pred_fallthru
      _
    %1462 = vsyncpa [#allocation4], 1
    %1463 = vsyncpa [#allocation7], 1
    %1464 = vsyncpa [#allocation5], 1

</llo_original>
